<compile_context>
chip_gen: v5e
topology: v5e:2x2
jax: 0.10.0
libtpu: 0.0.40
codegen_flags: <defaults>
</compile_context>

<pallas_src>
import jax
import jax.numpy as jnp
from jax import lax
from jax.experimental import pallas as pl
from jax.experimental.pallas import tpu as pltpu

# ---- model dimensions (small, synthetic) -----------------------------------
HID = 32            # hidden size
HEADS = 4           # attention heads
HEAD_DIM = HID // HEADS
FFN = 4 * HID       # dense_h_to_4h size
EPS = 1e-5          # Falcon layer_norm_epsilon
ROPE_BASE = 10000.0
NEG_INF = -1e30     # finite mask value (avoids inf-inf NaN risk)


# ---- in-kernel helpers ------------------------------------------------------
def _layernorm(x, gamma, beta):
    mu = jnp.mean(x, axis=-1, keepdims=True)
    var = jnp.mean(jnp.square(x - mu), axis=-1, keepdims=True)
    return (x - mu) * lax.rsqrt(var + EPS) * gamma + beta


def _gelu_tanh(x):
    # TODO(synk): PyTorch nn.GELU defaults to the exact erf form; the tanh
    # approximation differs at ~1e-3 but lowers cleanly (EUP tanh).
    c = 0.7978845608028654  # sqrt(2/pi)
    return 0.5 * x * (1.0 + jnp.tanh(c * (x + 0.044715 * x * x * x)))


# ---- fused all-layers kernel -------------------------------------------------
def falcon_stack_kernel(h_ref, cos_ref, sin_ref,
                        ln_g_ref, ln_b_ref, wqkv_ref, wo_ref, w1_ref, w2_ref,
                        lnf_g_ref, lnf_b_ref, out_ref):
    layer = pl.program_id(0)
    n_layers = pl.num_programs(0)
    BS, D = out_ref.shape
    S = cos_ref.shape[0]
    B = BS // S

    # layer 0: seed the resident hidden state.  out_ref has a constant
    # index_map, so it stays in VMEM across the whole layer grid (accumulator
    # pattern) and is written back to HBM exactly once.
    @pl.when(layer == 0)
    def _():
        out_ref[...] = h_ref[...]

    x = out_ref[...]                                   # (B*S, D) f32, resident

    # single input_layernorm feeding both attention and MLP (parallel_attn)
    ln = _layernorm(x, ln_g_ref[0], ln_b_ref[0])       # (B*S, D) f32
    ln_bf = ln.astype(jnp.bfloat16)

    # fused [Q | K | V] projection; 1/sqrt(head_dim) pre-folded into Q columns
    qkv = jnp.dot(ln_bf, wqkv_ref[0],
                  preferred_element_type=jnp.float32)  # (B*S, 3*HID) f32
    qkv4 = qkv.reshape(B, S, 3 * HEADS, HEAD_DIM)
    q = qkv4[:, :, 0 * HEADS:1 * HEADS, :]             # (B, S, H, hd)
    k = qkv4[:, :, 1 * HEADS:2 * HEADS, :]
    v = qkv4[:, :, 2 * HEADS:3 * HEADS, :]

    # RoPE: rotate_half(x) == sign * roll(x, hd//2) along head_dim; the +-1
    # sign is folded into the sin table, the roll lands in the XLU slot.
    cos = cos_ref[...]                                 # (S, 1, hd) f32
    sin = sin_ref[...]                                 # (S, 1, hd) f32, sign-folded
    q = q * cos + pltpu.roll(q, shift=HEAD_DIM // 2, axis=3) * sin
    k = k * cos + pltpu.roll(k, shift=HEAD_DIM // 2, axis=3) * sin

    qb = q.astype(jnp.bfloat16)
    kb = k.astype(jnp.bfloat16)
    vb = v.astype(jnp.bfloat16)

    # causal mask built in-kernel (iota + compare) once per layer at (B,S,S):
    # no (S,S) f32 HBM read and no per-head re-broadcast.
    row = lax.broadcasted_iota(jnp.int32, (B, S, S), 1)
    col = lax.broadcasted_iota(jnp.int32, (B, S, S), 2)
    mask = jnp.where(row >= col, jnp.float32(0.0), jnp.float32(NEG_INF))

    # attention: rank-3 einsums batched over B, short static loop over heads.
    # Each head's context feeds straight into the output projection through
    # the matching 8-row block of Wo, so there is no lane-width concat.
    attn_out = jnp.zeros((BS, D), jnp.float32)
    for hi in range(HEADS):
        sc = jnp.einsum('bqd,bkd->bqk', qb[:, :, hi, :], kb[:, :, hi, :],
                        preferred_element_type=jnp.float32) + mask     # (B,S,S)
        m = jnp.max(sc, axis=-1, keepdims=True)
        e = jnp.exp(sc - m)
        r = pl.reciprocal(jnp.sum(e, axis=-1, keepdims=True), approx=True)
        p = (e * r).astype(jnp.bfloat16)
        ctx_h = jnp.einsum('bqk,bkd->bqd', p, vb[:, :, hi, :],
                           preferred_element_type=jnp.float32)         # (B,S,hd)
        wo_h = wo_ref[0, hi * HEAD_DIM:(hi + 1) * HEAD_DIM, :]         # (hd, D) bf16
        attn_out = attn_out + jnp.dot(
            ctx_h.reshape(BS, HEAD_DIM).astype(jnp.bfloat16), wo_h,
            preferred_element_type=jnp.float32)

    # MLP branch reads the same layernorm output (Falcon parallel attn/MLP)
    h1 = jnp.dot(ln_bf, w1_ref[0], preferred_element_type=jnp.float32)  # (B*S, FFN)
    g1 = _gelu_tanh(h1).astype(jnp.bfloat16)
    mlp_out = jnp.dot(g1, w2_ref[0], preferred_element_type=jnp.float32)

    new_h = x + attn_out + mlp_out
    out_ref[...] = new_h

    # ln_f fused into the last layer's epilogue; single HBM store at the end
    @pl.when(layer == n_layers - 1)
    def _():
        out_ref[...] = _layernorm(new_h, lnf_g_ref[...], lnf_b_ref[...])


# ---- wrapper -----------------------------------------------------------------
def falcon_stack(h2, cos, sin, ln_g, ln_b, wqkv, wo, w1, w2, lnf_g, lnf_b):
    BS, D = h2.shape
    S = cos.shape[0]
    B = BS // S
    L = ln_g.shape[0]

    flops_per_layer = (
        2 * BS * D * (3 * HID)                        # QKV projection
        + 2 * 2 * B * HEADS * S * S * HEAD_DIM        # QK^T + PV
        + 2 * BS * HID * D                            # attn output projection
        + 2 * BS * D * FFN + 2 * BS * FFN * D         # MLP up + down
    )
    transcend_per_layer = B * HEADS * S * S + BS * FFN          # softmax exp + gelu tanh
    weight_bytes_per_layer = 2 * (D * 3 * HID + D * D + D * FFN + FFN * D)  # bf16
    cost = pl.CostEstimate(
        flops=L * flops_per_layer,
        transcendentals=L * transcend_per_layer,
        bytes_accessed=L * weight_bytes_per_layer + 2 * 4 * BS * D)

    return pl.pallas_call(
        falcon_stack_kernel,
        out_shape=jax.ShapeDtypeStruct((BS, D), jnp.float32),
        grid=(L,),
        in_specs=[
            pl.BlockSpec((BS, D), lambda l: (0, 0)),                # embeddings
            pl.BlockSpec((S, 1, HEAD_DIM), lambda l: (0, 0, 0)),    # rope cos
            pl.BlockSpec((S, 1, HEAD_DIM), lambda l: (0, 0, 0)),    # rope sin (sign-folded)
            pl.BlockSpec((1, 1, D), lambda l: (l, 0, 0)),           # ln gamma (per layer)
            pl.BlockSpec((1, 1, D), lambda l: (l, 0, 0)),           # ln beta
            pl.BlockSpec((1, D, 3 * HID), lambda l: (l, 0, 0)),     # fused QKV weight
            pl.BlockSpec((1, D, D), lambda l: (l, 0, 0)),           # attn out proj
            pl.BlockSpec((1, D, FFN), lambda l: (l, 0, 0)),         # dense_h_to_4h
            pl.BlockSpec((1, FFN, D), lambda l: (l, 0, 0)),         # dense_4h_to_h
            pl.BlockSpec((1, D), lambda l: (0, 0)),                 # ln_f gamma
            pl.BlockSpec((1, D), lambda l: (0, 0)),                 # ln_f beta
        ],
        out_specs=pl.BlockSpec((BS, D), lambda l: (0, 0)),          # resident hidden state
        compiler_params=pltpu.CompilerParams(
            dimension_semantics=("arbitrary",),                     # layers are sequential
            vmem_limit_bytes=32 * 1024 * 1024),
        cost_estimate=cost,
    )(h2, cos, sin, ln_g, ln_b, wqkv, wo, w1, w2, lnf_g, lnf_b)


def rope_tables_signed(seqlen, head_dim, base=ROPE_BASE):
    inv_freq = 1.0 / (base ** (jnp.arange(0, head_dim, 2, dtype=jnp.float32) / head_dim))
    t = jnp.arange(seqlen, dtype=jnp.float32)
    freqs = jnp.outer(t, inv_freq)                       # (S, hd/2)
    emb = jnp.concatenate([freqs, freqs], axis=-1)       # (S, hd)
    # rotate_half(x) = sign * roll(x, hd//2) with sign = [-1]*hd/2 ++ [+1]*hd/2;
    # fold the sign into the sin table so the kernel only needs roll + mul + add.
    sign = jnp.concatenate([-jnp.ones((head_dim // 2,), jnp.float32),
                            jnp.ones((head_dim // 2,), jnp.float32)])
    return jnp.cos(emb), jnp.sin(emb) * sign


def pack_params(params):
    """Stack per-layer weights along a leading layer axis, fold the attention
    scale into the Q columns, and cast matmul weights to bf16."""
    # TODO(synk): assumes AutoAWQ fused QKV columns are ordered [Q | K | V]
    # with heads contiguous inside each block; verify vs. real checkpoints.
    # TODO(synk): at real sizes keep the AWQ int4/int8 weights quantized in HBM
    # and dequantize in-kernel instead of pre-casting to bf16.
    scale = 1.0 / (HEAD_DIM ** 0.5)
    ln_g, ln_b, wf, wo, w1, w2 = [], [], [], [], [], []
    for (g, b, wqkv, wo_l, w1_l, w2_l) in params["layers"]:
        wq = wqkv[:, :HID] * scale                    # fold 1/sqrt(head_dim)
        wfused = jnp.concatenate([wq, wqkv[:, HID:]], axis=1)   # (D, 3*HID)
        ln_g.append(g.reshape(1, 1, HID))
        ln_b.append(b.reshape(1, 1, HID))
        wf.append(wfused.astype(jnp.bfloat16)[None])
        wo.append(wo_l.astype(jnp.bfloat16)[None])
        w1.append(w1_l.astype(jnp.bfloat16)[None])
        w2.append(w2_l.astype(jnp.bfloat16)[None])
    return {
        "embed": params["embed"],
        "ln_g": jnp.concatenate(ln_g, axis=0),        # (L, 1, D)
        "ln_b": jnp.concatenate(ln_b, axis=0),        # (L, 1, D)
        "wqkv": jnp.concatenate(wf, axis=0),          # (L, D, 3*HID) bf16
        "wo": jnp.concatenate(wo, axis=0),            # (L, D, D) bf16
        "w1": jnp.concatenate(w1, axis=0),            # (L, D, FFN) bf16
        "w2": jnp.concatenate(w2, axis=0),            # (L, FFN, D) bf16
        "lnf_g": params["lnf_g"],
        "lnf_b": params["lnf_b"],
    }


# ---- deterministic parameter init -------------------------------------------
def init_params(key, vocab_size, n_layers):
    keys = jax.random.split(key, 1 + 4 * n_layers)
    params = {
        "embed": jax.random.normal(keys[0], (vocab_size, HID), jnp.float32) * 0.02,
        "layers": [],
        "lnf_g": jnp.ones((1, HID), jnp.float32),
        "lnf_b": jnp.zeros((1, HID), jnp.float32),
    }
    for li in range(n_layers):
        k0, k1, k2, k3 = keys[1 + 4 * li: 1 + 4 * (li + 1)]
        layer = (
            jnp.ones((1, HID), jnp.float32),                            # ln gamma
            jnp.zeros((1, HID), jnp.float32),                           # ln beta
            jax.random.normal(k0, (HID, 3 * HID), jnp.float32) * 0.02,  # wqkv [in,out]
            jax.random.normal(k1, (HID, HID), jnp.float32) * 0.02,      # wo
            jax.random.normal(k2, (HID, FFN), jnp.float32) * 0.02,      # dense_h_to_4h
            jax.random.normal(k3, (FFN, HID), jnp.float32) * 0.02,      # dense_4h_to_h
        )
        params["layers"].append(layer)
    return params


# ---- full model forward ------------------------------------------------------
@jax.jit
def falcon_forward(packed, input_ids):
    B, S = input_ids.shape
    h = jnp.take(packed["embed"], input_ids, axis=0)      # (B, S, D) embedding (glue)
    cos, sin_signed = rope_tables_signed(S, HEAD_DIM)
    cos = cos.reshape(S, 1, HEAD_DIM)                     # broadcast over heads in-kernel
    sin_signed = sin_signed.reshape(S, 1, HEAD_DIM)

    h2 = h.reshape(B * S, HID)
    out2 = falcon_stack(h2, cos, sin_signed,
                        packed["ln_g"], packed["ln_b"], packed["wqkv"],
                        packed["wo"], packed["w1"], packed["w2"],
                        packed["lnf_g"], packed["lnf_b"])
    return out2.reshape(B, S, HID)                        # last_hidden_state (ln_f applied)


if __name__ == "__main__":
    key = jax.random.PRNGKey(0)
    kp, ki = jax.random.split(key)

    vocab_size = 64
    n_layers = 2
    batch, seqlen = 2, 8

    params = init_params(kp, vocab_size, n_layers)
    packed = pack_params(params)
    input_ids = jax.random.randint(ki, (batch, seqlen), 0, vocab_size, dtype=jnp.int32)

    out = falcon_forward(packed, input_ids)
    jax.block_until_ready(out)
    assert out.shape == (batch, seqlen, HID)
    assert out.dtype == jnp.float32
    print("KERNEL_OK")
</pallas_src>

<mosaic_0001>
module attributes {stable_mosaic.version = 11 : i64} {
  func.func @falcon_stack_kernel(%arg0: i32, %arg1: memref<16x32xf32, #tpu.memory_space<vmem>>, %arg2: memref<8x1x8xf32, #tpu.memory_space<vmem>>, %arg3: memref<8x1x8xf32, #tpu.memory_space<vmem>>, %arg4: memref<1x1x32xf32, #tpu.memory_space<vmem>>, %arg5: memref<1x1x32xf32, #tpu.memory_space<vmem>>, %arg6: memref<1x32x96xbf16, #tpu.memory_space<vmem>>, %arg7: memref<1x32x32xbf16, #tpu.memory_space<vmem>>, %arg8: memref<1x32x128xbf16, #tpu.memory_space<vmem>>, %arg9: memref<1x128x32xbf16, #tpu.memory_space<vmem>>, %arg10: memref<1x32xf32, #tpu.memory_space<vmem>>, %arg11: memref<1x32xf32, #tpu.memory_space<vmem>>, %arg12: memref<16x32xf32, #tpu.memory_space<vmem>>) attributes {dimension_semantics = [#tpu.dimension_semantics<arbitrary>], iteration_bounds = array<i64: 2>, scalar_prefetch = 0 : i64, scratch_operands = 0 : i64, tpu.core_type = #tpu.core_type<tc>, window_params = [{pipeline_mode = #tpu.pipeline_mode<synchronous>, transform_indices = @transform_0, window_bounds = array<i64: 16, 32>}, {pipeline_mode = #tpu.pipeline_mode<synchronous>, transform_indices = @transform_1, window_bounds = array<i64: 8, 1, 8>}, {pipeline_mode = #tpu.pipeline_mode<synchronous>, transform_indices = @transform_2, window_bounds = array<i64: 8, 1, 8>}, {transform_indices = @transform_3, window_bounds = array<i64: 1, 1, 32>}, {transform_indices = @transform_4, window_bounds = array<i64: 1, 1, 32>}, {transform_indices = @transform_5, window_bounds = array<i64: 1, 32, 96>}, {transform_indices = @transform_6, window_bounds = array<i64: 1, 32, 32>}, {transform_indices = @transform_7, window_bounds = array<i64: 1, 32, 128>}, {transform_indices = @transform_8, window_bounds = array<i64: 1, 128, 32>}, {pipeline_mode = #tpu.pipeline_mode<synchronous>, transform_indices = @transform_9, window_bounds = array<i64: 1, 32>}, {pipeline_mode = #tpu.pipeline_mode<synchronous>, transform_indices = @transform_10, window_bounds = array<i64: 1, 32>}, {pipeline_mode = #tpu.pipeline_mode<synchronous>, transform_indices = @transform_11, window_bounds = array<i64: 16, 32>}]} {
    %c0_i32 = arith.constant 0 : i32
    %0 = arith.cmpi eq, %arg0, %c0_i32 : i32
    %1 = arith.extui %0 : i1 to i32
    %c0_i32_0 = arith.constant 0 : i32
    %2 = arith.cmpi ne, %1, %c0_i32_0 : i32
    scf.if %2 {
      %c0_70 = arith.constant 0 : index
      %c0_71 = arith.constant 0 : index
      %196 = vector.load %arg1[%c0_70, %c0_71] : memref<16x32xf32, #tpu.memory_space<vmem>>, vector<16x32xf32>
      %c0_72 = arith.constant 0 : index
      %c0_73 = arith.constant 0 : index
      %197 = vector.load %arg12[%c0_72, %c0_73] : memref<16x32xf32, #tpu.memory_space<vmem>>, vector<16x32xf32>
      tpu.vector_store %arg12[%c0_72, %c0_73], %196 {strides = array<i32>} : memref<16x32xf32, #tpu.memory_space<vmem>>, vector<16x32xf32>,
    } else {
    }
    %c0 = arith.constant 0 : index
    %c0_1 = arith.constant 0 : index
    %3 = vector.load %arg12[%c0, %c0_1] : memref<16x32xf32, #tpu.memory_space<vmem>>, vector<16x32xf32>
    %c0_2 = arith.constant 0 : index
    %c0_3 = arith.constant 0 : index
    %c0_4 = arith.constant 0 : index
    %4 = vector.load %arg4[%c0_2, %c0_3, %c0_4] : memref<1x1x32xf32, #tpu.memory_space<vmem>>, vector<1x1x32xf32>
    %5 = vector.shape_cast %4 : vector<1x1x32xf32> to vector<1x32xf32>
    %c0_5 = arith.constant 0 : index
    %c0_6 = arith.constant 0 : index
    %c0_7 = arith.constant 0 : index
    %6 = vector.load %arg5[%c0_5, %c0_6, %c0_7] : memref<1x1x32xf32, #tpu.memory_space<vmem>>, vector<1x1x32xf32>
    %7 = vector.shape_cast %6 : vector<1x1x32xf32> to vector<1x32xf32>
    %cst = arith.constant dense<0.000000e+00> : vector<16xf32>
    %8 = vector.multi_reduction <add>, %3, %cst [1] : vector<16x32xf32> to vector<16xf32>
    %9 = vector.shape_cast %8 : vector<16xf32> to vector<16x1xf32>
    %cst_8 = arith.constant 3.200000e+01 : f32
    %10 = vector.broadcast %cst_8 : f32 to vector<16x1xf32>
    %11 = arith.divf %9, %10 : vector<16x1xf32>
    %12 = vector.broadcast %11 : vector<16x1xf32> to vector<16x32xf32>
    %13 = arith.subf %3, %12 : vector<16x32xf32>
    %14 = arith.mulf %13, %13 : vector<16x32xf32>
    %cst_9 = arith.constant dense<0.000000e+00> : vector<16xf32>
    %15 = vector.multi_reduction <add>, %14, %cst_9 [1] : vector<16x32xf32> to vector<16xf32>
    %16 = vector.shape_cast %15 : vector<16xf32> to vector<16x1xf32>
    %cst_10 = arith.constant 3.200000e+01 : f32
    %17 = vector.broadcast %cst_10 : f32 to vector<16x1xf32>
    %18 = arith.divf %16, %17 : vector<16x1xf32>
    %19 = vector.broadcast %11 : vector<16x1xf32> to vector<16x32xf32>
    %20 = arith.subf %3, %19 : vector<16x32xf32>
    %cst_11 = arith.constant 9.99999974E-6 : f32
    %21 = vector.broadcast %cst_11 : f32 to vector<16x1xf32>
    %22 = arith.addf %18, %21 : vector<16x1xf32>
    %23 = math.rsqrt %22 : vector<16x1xf32>
    %24 = vector.broadcast %23 : vector<16x1xf32> to vector<16x32xf32>
    %25 = arith.mulf %20, %24 : vector<16x32xf32>
    %26 = vector.broadcast %5 : vector<1x32xf32> to vector<16x32xf32>
    %27 = arith.mulf %25, %26 : vector<16x32xf32>
    %28 = vector.broadcast %7 : vector<1x32xf32> to vector<16x32xf32>
    %29 = arith.addf %27, %28 : vector<16x32xf32>
    %30 = arith.truncf %29 : vector<16x32xf32> to vector<16x32xbf16>
    %c0_12 = arith.constant 0 : index
    %c0_13 = arith.constant 0 : index
    %c0_14 = arith.constant 0 : index
    %31 = vector.load %arg6[%c0_12, %c0_13, %c0_14] : memref<1x32x96xbf16, #tpu.memory_space<vmem>>, vector<1x32x96xbf16>
    %32 = vector.shape_cast %31 : vector<1x32x96xbf16> to vector<32x96xbf16>
    %cst_15 = arith.constant dense<0.000000e+00> : vector<16x96xf32>
    %33 = tpu.matmul %30, %32, %cst_15 {dimension_numbers = #tpu.dot_dimension_numbers<[1], [0], [0], [1], [0, 0, 1, 1], [], []>} : vector<16x32xbf16>, vector<32x96xbf16>, vector<16x96xf32> -> vector<16x96xf32>
    %34 = vector.shape_cast %33 : vector<16x96xf32> to vector<2x8x12x8xf32>
    %35 = vector.extract_strided_slice %34 {offsets = [0, 0, 0, 0], sizes = [2, 8, 4, 8], strides = [1, 1, 1, 1]} : vector<2x8x12x8xf32> to vector<2x8x4x8xf32>
    %36 = vector.extract_strided_slice %34 {offsets = [0, 0, 4, 0], sizes = [2, 8, 4, 8], strides = [1, 1, 1, 1]} : vector<2x8x12x8xf32> to vector<2x8x4x8xf32>
    %37 = vector.extract_strided_slice %34 {offsets = [0, 0, 8, 0], sizes = [2, 8, 4, 8], strides = [1, 1, 1, 1]} : vector<2x8x12x8xf32> to vector<2x8x4x8xf32>
    %c0_16 = arith.constant 0 : index
    %c0_17 = arith.constant 0 : index
    %c0_18 = arith.constant 0 : index
    %38 = vector.load %arg2[%c0_16, %c0_17, %c0_18] : memref<8x1x8xf32, #tpu.memory_space<vmem>>, vector<8x1x8xf32>
    %c0_19 = arith.constant 0 : index
    %c0_20 = arith.constant 0 : index
    %c0_21 = arith.constant 0 : index
    %39 = vector.load %arg3[%c0_19, %c0_20, %c0_21] : memref<8x1x8xf32, #tpu.memory_space<vmem>>, vector<8x1x8xf32>
    %40 = vector.shape_cast %38 : vector<8x1x8xf32> to vector<1x8x1x8xf32>
    %41 = vector.broadcast %40 : vector<1x8x1x8xf32> to vector<2x8x4x8xf32>
    %42 = arith.mulf %35, %41 : vector<2x8x4x8xf32>
    %c4_i32 = arith.constant 4 : i32
    %43 = tpu.dynamic_rotate %35 by %c4_i32 dim 3 : vector<2x8x4x8xf32>, i32 -> vector<2x8x4x8xf32>
    %44 = vector.shape_cast %39 : vector<8x1x8xf32> to vector<1x8x1x8xf32>
    %45 = vector.broadcast %44 : vector<1x8x1x8xf32> to vector<2x8x4x8xf32>
    %46 = arith.mulf %43, %45 : vector<2x8x4x8xf32>
    %47 = arith.addf %42, %46 : vector<2x8x4x8xf32>
    %48 = vector.shape_cast %38 : vector<8x1x8xf32> to vector<1x8x1x8xf32>
    %49 = vector.broadcast %48 : vector<1x8x1x8xf32> to vector<2x8x4x8xf32>
    %50 = arith.mulf %36, %49 : vector<2x8x4x8xf32>
    %c4_i32_22 = arith.constant 4 : i32
    %51 = tpu.dynamic_rotate %36 by %c4_i32_22 dim 3 : vector<2x8x4x8xf32>, i32 -> vector<2x8x4x8xf32>
    %52 = vector.shape_cast %39 : vector<8x1x8xf32> to vector<1x8x1x8xf32>
    %53 = vector.broadcast %52 : vector<1x8x1x8xf32> to vector<2x8x4x8xf32>
    %54 = arith.mulf %51, %53 : vector<2x8x4x8xf32>
    %55 = arith.addf %50, %54 : vector<2x8x4x8xf32>
    %56 = arith.truncf %47 : vector<2x8x4x8xf32> to vector<2x8x4x8xbf16>
    %57 = arith.truncf %55 : vector<2x8x4x8xf32> to vector<2x8x4x8xbf16>
    %58 = arith.truncf %37 : vector<2x8x4x8xf32> to vector<2x8x4x8xbf16>
    %59 = tpu.iota {dimensions = array<i32: 1>} : vector<2x8x8xi32>
    %60 = tpu.iota {dimensions = array<i32: 2>} : vector<2x8x8xi32>
    %61 = arith.cmpi sge, %59, %60 : vector<2x8x8xi32>
    %cst_23 = arith.constant 0.000000e+00 : f32
    %cst_24 = arith.constant -1.000000e+30 : f32
    %62 = vector.broadcast %cst_23 : f32 to vector<2x8x8xf32>
    %63 = vector.broadcast %cst_24 : f32 to vector<2x8x8xf32>
    %64 = arith.select %61, %62, %63 : vector<2x8x8xi1>, vector<2x8x8xf32>
    %cst_25 = arith.constant 0.000000e+00 : f32
    %65 = vector.broadcast %cst_25 : f32 to vector<16x32xf32>
    %66 = vector.extract_strided_slice %56 {offsets = [0, 0, 0, 0], sizes = [2, 8, 1, 8], strides = [1, 1, 1, 1]} : vector<2x8x4x8xbf16> to vector<2x8x1x8xbf16>
    %67 = vector.shape_cast %66 : vector<2x8x1x8xbf16> to vector<2x8x8xbf16>
    %68 = vector.extract_strided_slice %57 {offsets = [0, 0, 0, 0], sizes = [2, 8, 1, 8], strides = [1, 1, 1, 1]} : vector<2x8x4x8xbf16> to vector<2x8x1x8xbf16>
    %69 = vector.shape_cast %68 : vector<2x8x1x8xbf16> to vector<2x8x8xbf16>
    "tpu.trace_start"() <{level = 10 : i32, message = "bqd,bkd->bqk"}> : () -> ()
    %cst_26 = arith.constant dense<0.000000e+00> : vector<2x8x8xf32>
    %70 = tpu.matmul %67, %69, %cst_26 {dimension_numbers = #tpu.dot_dimension_numbers<[2], [2], [1], [1], [0, 0, 0, 1, 1, 1], [0], [0]>} : vector<2x8x8xbf16>, vector<2x8x8xbf16>, vector<2x8x8xf32> -> vector<2x8x8xf32>
    "tpu.trace_stop"() : () -> ()
    %71 = arith.addf %70, %64 : vector<2x8x8xf32>
    %cst_27 = arith.constant dense<0xFF800000> : vector<2x8xf32>
    %72 = vector.multi_reduction <maximumf>, %71, %cst_27 [2] : vector<2x8x8xf32> to vector<2x8xf32>
    %73 = vector.shape_cast %72 : vector<2x8xf32> to vector<2x8x1xf32>
    %74 = vector.broadcast %73 : vector<2x8x1xf32> to vector<2x8x8xf32>
    %75 = arith.subf %71, %74 : vector<2x8x8xf32>
    %76 = math.exp %75 : vector<2x8x8xf32>
    %cst_28 = arith.constant dense<0.000000e+00> : vector<2x8xf32>
    %77 = vector.multi_reduction <add>, %76, %cst_28 [2] : vector<2x8x8xf32> to vector<2x8xf32>
    %78 = vector.shape_cast %77 : vector<2x8xf32> to vector<2x8x1xf32>
    %79 = tpu.reciprocal %78 {approx = true} : vector<2x8x1xf32> -> vector<2x8x1xf32>
    %80 = vector.broadcast %79 : vector<2x8x1xf32> to vector<2x8x8xf32>
    %81 = arith.mulf %76, %80 : vector<2x8x8xf32>
    %82 = arith.truncf %81 : vector<2x8x8xf32> to vector<2x8x8xbf16>
    %83 = vector.extract_strided_slice %58 {offsets = [0, 0, 0, 0], sizes = [2, 8, 1, 8], strides = [1, 1, 1, 1]} : vector<2x8x4x8xbf16> to vector<2x8x1x8xbf16>
    %84 = vector.shape_cast %83 : vector<2x8x1x8xbf16> to vector<2x8x8xbf16>
    "tpu.trace_start"() <{level = 10 : i32, message = "bqk,bkd->bqd"}> : () -> ()
    %cst_29 = arith.constant dense<0.000000e+00> : vector<2x8x8xf32>
    %85 = tpu.matmul %82, %84, %cst_29 {dimension_numbers = #tpu.dot_dimension_numbers<[2], [1], [1], [2], [0, 0, 0, 1, 1, 2], [0], [0]>} : vector<2x8x8xbf16>, vector<2x8x8xbf16>, vector<2x8x8xf32> -> vector<2x8x8xf32>
    "tpu.trace_stop"() : () -> ()
    %c0_30 = arith.constant 0 : index
    %c0_31 = arith.constant 0 : index
    %c0_32 = arith.constant 0 : index
    %86 = vector.load %arg7[%c0_30, %c0_31, %c0_32] : memref<1x32x32xbf16, #tpu.memory_space<vmem>>, vector<1x8x32xbf16>
    %87 = vector.shape_cast %86 : vector<1x8x32xbf16> to vector<8x32xbf16>
    %88 = vector.shape_cast %85 : vector<2x8x8xf32> to vector<16x8xf32>
    %89 = arith.truncf %88 : vector<16x8xf32> to vector<16x8xbf16>
    %cst_33 = arith.constant dense<0.000000e+00> : vector<16x32xf32>
    %90 = tpu.matmul %89, %87, %cst_33 {dimension_numbers = #tpu.dot_dimension_numbers<[1], [0], [0], [1], [0, 0, 1, 1], [], []>} : vector<16x8xbf16>, vector<8x32xbf16>, vector<16x32xf32> -> vector<16x32xf32>
    %91 = arith.addf %65, %90 : vector<16x32xf32>
    %92 = vector.extract_strided_slice %56 {offsets = [0, 0, 1, 0], sizes = [2, 8, 1, 8], strides = [1, 1, 1, 1]} : vector<2x8x4x8xbf16> to vector<2x8x1x8xbf16>
    %93 = vector.shape_cast %92 : vector<2x8x1x8xbf16> to vector<2x8x8xbf16>
    %94 = vector.extract_strided_slice %57 {offsets = [0, 0, 1, 0], sizes = [2, 8, 1, 8], strides = [1, 1, 1, 1]} : vector<2x8x4x8xbf16> to vector<2x8x1x8xbf16>
    %95 = vector.shape_cast %94 : vector<2x8x1x8xbf16> to vector<2x8x8xbf16>
    "tpu.trace_start"() <{level = 10 : i32, message = "bqd,bkd->bqk"}> : () -> ()
    %cst_34 = arith.constant dense<0.000000e+00> : vector<2x8x8xf32>
    %96 = tpu.matmul %93, %95, %cst_34 {dimension_numbers = #tpu.dot_dimension_numbers<[2], [2], [1], [1], [0, 0, 0, 1, 1, 1], [0], [0]>} : vector<2x8x8xbf16>, vector<2x8x8xbf16>, vector<2x8x8xf32> -> vector<2x8x8xf32>
    "tpu.trace_stop"() : () -> ()
    %97 = arith.addf %96, %64 : vector<2x8x8xf32>
    %cst_35 = arith.constant dense<0xFF800000> : vector<2x8xf32>
    %98 = vector.multi_reduction <maximumf>, %97, %cst_35 [2] : vector<2x8x8xf32> to vector<2x8xf32>
    %99 = vector.shape_cast %98 : vector<2x8xf32> to vector<2x8x1xf32>
    %100 = vector.broadcast %99 : vector<2x8x1xf32> to vector<2x8x8xf32>
    %101 = arith.subf %97, %100 : vector<2x8x8xf32>
    %102 = math.exp %101 : vector<2x8x8xf32>
    %cst_36 = arith.constant dense<0.000000e+00> : vector<2x8xf32>
    %103 = vector.multi_reduction <add>, %102, %cst_36 [2] : vector<2x8x8xf32> to vector<2x8xf32>
    %104 = vector.shape_cast %103 : vector<2x8xf32> to vector<2x8x1xf32>
    %105 = tpu.reciprocal %104 {approx = true} : vector<2x8x1xf32> -> vector<2x8x1xf32>
    %106 = vector.broadcast %105 : vector<2x8x1xf32> to vector<2x8x8xf32>
    %107 = arith.mulf %102, %106 : vector<2x8x8xf32>
    %108 = arith.truncf %107 : vector<2x8x8xf32> to vector<2x8x8xbf16>
    %109 = vector.extract_strided_slice %58 {offsets = [0, 0, 1, 0], sizes = [2, 8, 1, 8], strides = [1, 1, 1, 1]} : vector<2x8x4x8xbf16> to vector<2x8x1x8xbf16>
    %110 = vector.shape_cast %109 : vector<2x8x1x8xbf16> to vector<2x8x8xbf16>
    "tpu.trace_start"() <{level = 10 : i32, message = "bqk,bkd->bqd"}> : () -> ()
    %cst_37 = arith.constant dense<0.000000e+00> : vector<2x8x8xf32>
    %111 = tpu.matmul %108, %110, %cst_37 {dimension_numbers = #tpu.dot_dimension_numbers<[2], [1], [1], [2], [0, 0, 0, 1, 1, 2], [0], [0]>} : vector<2x8x8xbf16>, vector<2x8x8xbf16>, vector<2x8x8xf32> -> vector<2x8x8xf32>
    "tpu.trace_stop"() : () -> ()
    %c0_38 = arith.constant 0 : index
    %c8 = arith.constant 8 : index
    %c0_39 = arith.constant 0 : index
    %112 = vector.load %arg7[%c0_38, %c8, %c0_39] : memref<1x32x32xbf16, #tpu.memory_space<vmem>>, vector<1x8x32xbf16>
    %113 = vector.shape_cast %112 : vector<1x8x32xbf16> to vector<8x32xbf16>
    %114 = vector.shape_cast %111 : vector<2x8x8xf32> to vector<16x8xf32>
    %115 = arith.truncf %114 : vector<16x8xf32> to vector<16x8xbf16>
    %cst_40 = arith.constant dense<0.000000e+00> : vector<16x32xf32>
    %116 = tpu.matmul %115, %113, %cst_40 {dimension_numbers = #tpu.dot_dimension_numbers<[1], [0], [0], [1], [0, 0, 1, 1], [], []>} : vector<16x8xbf16>, vector<8x32xbf16>, vector<16x32xf32> -> vector<16x32xf32>
    %117 = arith.addf %91, %116 : vector<16x32xf32>
    %118 = vector.extract_strided_slice %56 {offsets = [0, 0, 2, 0], sizes = [2, 8, 1, 8], strides = [1, 1, 1, 1]} : vector<2x8x4x8xbf16> to vector<2x8x1x8xbf16>
    %119 = vector.shape_cast %118 : vector<2x8x1x8xbf16> to vector<2x8x8xbf16>
    %120 = vector.extract_strided_slice %57 {offsets = [0, 0, 2, 0], sizes = [2, 8, 1, 8], strides = [1, 1, 1, 1]} : vector<2x8x4x8xbf16> to vector<2x8x1x8xbf16>
    %121 = vector.shape_cast %120 : vector<2x8x1x8xbf16> to vector<2x8x8xbf16>
    "tpu.trace_start"() <{level = 10 : i32, message = "bqd,bkd->bqk"}> : () -> ()
    %cst_41 = arith.constant dense<0.000000e+00> : vector<2x8x8xf32>
    %122 = tpu.matmul %119, %121, %cst_41 {dimension_numbers = #tpu.dot_dimension_numbers<[2], [2], [1], [1], [0, 0, 0, 1, 1, 1], [0], [0]>} : vector<2x8x8xbf16>, vector<2x8x8xbf16>, vector<2x8x8xf32> -> vector<2x8x8xf32>
    "tpu.trace_stop"() : () -> ()
    %123 = arith.addf %122, %64 : vector<2x8x8xf32>
    %cst_42 = arith.constant dense<0xFF800000> : vector<2x8xf32>
    %124 = vector.multi_reduction <maximumf>, %123, %cst_42 [2] : vector<2x8x8xf32> to vector<2x8xf32>
    %125 = vector.shape_cast %124 : vector<2x8xf32> to vector<2x8x1xf32>
    %126 = vector.broadcast %125 : vector<2x8x1xf32> to vector<2x8x8xf32>
    %127 = arith.subf %123, %126 : vector<2x8x8xf32>
    %128 = math.exp %127 : vector<2x8x8xf32>
    %cst_43 = arith.constant dense<0.000000e+00> : vector<2x8xf32>
    %129 = vector.multi_reduction <add>, %128, %cst_43 [2] : vector<2x8x8xf32> to vector<2x8xf32>
    %130 = vector.shape_cast %129 : vector<2x8xf32> to vector<2x8x1xf32>
    %131 = tpu.reciprocal %130 {approx = true} : vector<2x8x1xf32> -> vector<2x8x1xf32>
    %132 = vector.broadcast %131 : vector<2x8x1xf32> to vector<2x8x8xf32>
    %133 = arith.mulf %128, %132 : vector<2x8x8xf32>
    %134 = arith.truncf %133 : vector<2x8x8xf32> to vector<2x8x8xbf16>
    %135 = vector.extract_strided_slice %58 {offsets = [0, 0, 2, 0], sizes = [2, 8, 1, 8], strides = [1, 1, 1, 1]} : vector<2x8x4x8xbf16> to vector<2x8x1x8xbf16>
    %136 = vector.shape_cast %135 : vector<2x8x1x8xbf16> to vector<2x8x8xbf16>
    "tpu.trace_start"() <{level = 10 : i32, message = "bqk,bkd->bqd"}> : () -> ()
    %cst_44 = arith.constant dense<0.000000e+00> : vector<2x8x8xf32>
    %137 = tpu.matmul %134, %136, %cst_44 {dimension_numbers = #tpu.dot_dimension_numbers<[2], [1], [1], [2], [0, 0, 0, 1, 1, 2], [0], [0]>} : vector<2x8x8xbf16>, vector<2x8x8xbf16>, vector<2x8x8xf32> -> vector<2x8x8xf32>
    "tpu.trace_stop"() : () -> ()
    %c0_45 = arith.constant 0 : index
    %c16 = arith.constant 16 : index
    %c0_46 = arith.constant 0 : index
    %138 = vector.load %arg7[%c0_45, %c16, %c0_46] : memref<1x32x32xbf16, #tpu.memory_space<vmem>>, vector<1x8x32xbf16>
    %139 = vector.shape_cast %138 : vector<1x8x32xbf16> to vector<8x32xbf16>
    %140 = vector.shape_cast %137 : vector<2x8x8xf32> to vector<16x8xf32>
    %141 = arith.truncf %140 : vector<16x8xf32> to vector<16x8xbf16>
    %cst_47 = arith.constant dense<0.000000e+00> : vector<16x32xf32>
    %142 = tpu.matmul %141, %139, %cst_47 {dimension_numbers = #tpu.dot_dimension_numbers<[1], [0], [0], [1], [0, 0, 1, 1], [], []>} : vector<16x8xbf16>, vector<8x32xbf16>, vector<16x32xf32> -> vector<16x32xf32>
    %143 = arith.addf %117, %142 : vector<16x32xf32>
    %144 = vector.extract_strided_slice %56 {offsets = [0, 0, 3, 0], sizes = [2, 8, 1, 8], strides = [1, 1, 1, 1]} : vector<2x8x4x8xbf16> to vector<2x8x1x8xbf16>
    %145 = vector.shape_cast %144 : vector<2x8x1x8xbf16> to vector<2x8x8xbf16>
    %146 = vector.extract_strided_slice %57 {offsets = [0, 0, 3, 0], sizes = [2, 8, 1, 8], strides = [1, 1, 1, 1]} : vector<2x8x4x8xbf16> to vector<2x8x1x8xbf16>
    %147 = vector.shape_cast %146 : vector<2x8x1x8xbf16> to vector<2x8x8xbf16>
    "tpu.trace_start"() <{level = 10 : i32, message = "bqd,bkd->bqk"}> : () -> ()
    %cst_48 = arith.constant dense<0.000000e+00> : vector<2x8x8xf32>
    %148 = tpu.matmul %145, %147, %cst_48 {dimension_numbers = #tpu.dot_dimension_numbers<[2], [2], [1], [1], [0, 0, 0, 1, 1, 1], [0], [0]>} : vector<2x8x8xbf16>, vector<2x8x8xbf16>, vector<2x8x8xf32> -> vector<2x8x8xf32>
    "tpu.trace_stop"() : () -> ()
    %149 = arith.addf %148, %64 : vector<2x8x8xf32>
    %cst_49 = arith.constant dense<0xFF800000> : vector<2x8xf32>
    %150 = vector.multi_reduction <maximumf>, %149, %cst_49 [2] : vector<2x8x8xf32> to vector<2x8xf32>
    %151 = vector.shape_cast %150 : vector<2x8xf32> to vector<2x8x1xf32>
    %152 = vector.broadcast %151 : vector<2x8x1xf32> to vector<2x8x8xf32>
    %153 = arith.subf %149, %152 : vector<2x8x8xf32>
    %154 = math.exp %153 : vector<2x8x8xf32>
    %cst_50 = arith.constant dense<0.000000e+00> : vector<2x8xf32>
    %155 = vector.multi_reduction <add>, %154, %cst_50 [2] : vector<2x8x8xf32> to vector<2x8xf32>
    %156 = vector.shape_cast %155 : vector<2x8xf32> to vector<2x8x1xf32>
    %157 = tpu.reciprocal %156 {approx = true} : vector<2x8x1xf32> -> vector<2x8x1xf32>
    %158 = vector.broadcast %157 : vector<2x8x1xf32> to vector<2x8x8xf32>
    %159 = arith.mulf %154, %158 : vector<2x8x8xf32>
    %160 = arith.truncf %159 : vector<2x8x8xf32> to vector<2x8x8xbf16>
    %161 = vector.extract_strided_slice %58 {offsets = [0, 0, 3, 0], sizes = [2, 8, 1, 8], strides = [1, 1, 1, 1]} : vector<2x8x4x8xbf16> to vector<2x8x1x8xbf16>
    %162 = vector.shape_cast %161 : vector<2x8x1x8xbf16> to vector<2x8x8xbf16>
    "tpu.trace_start"() <{level = 10 : i32, message = "bqk,bkd->bqd"}> : () -> ()
    %cst_51 = arith.constant dense<0.000000e+00> : vector<2x8x8xf32>
    %163 = tpu.matmul %160, %162, %cst_51 {dimension_numbers = #tpu.dot_dimension_numbers<[2], [1], [1], [2], [0, 0, 0, 1, 1, 2], [0], [0]>} : vector<2x8x8xbf16>, vector<2x8x8xbf16>, vector<2x8x8xf32> -> vector<2x8x8xf32>
    "tpu.trace_stop"() : () -> ()
    %c0_52 = arith.constant 0 : index
    %c24 = arith.constant 24 : index
    %c0_53 = arith.constant 0 : index
    %164 = vector.load %arg7[%c0_52, %c24, %c0_53] : memref<1x32x32xbf16, #tpu.memory_space<vmem>>, vector<1x8x32xbf16>
    %165 = vector.shape_cast %164 : vector<1x8x32xbf16> to vector<8x32xbf16>
    %166 = vector.shape_cast %163 : vector<2x8x8xf32> to vector<16x8xf32>
    %167 = arith.truncf %166 : vector<16x8xf32> to vector<16x8xbf16>
    %cst_54 = arith.constant dense<0.000000e+00> : vector<16x32xf32>
    %168 = tpu.matmul %167, %165, %cst_54 {dimension_numbers = #tpu.dot_dimension_numbers<[1], [0], [0], [1], [0, 0, 1, 1], [], []>} : vector<16x8xbf16>, vector<8x32xbf16>, vector<16x32xf32> -> vector<16x32xf32>
    %169 = arith.addf %143, %168 : vector<16x32xf32>
    %c0_55 = arith.constant 0 : index
    %c0_56 = arith.constant 0 : index
    %c0_57 = arith.constant 0 : index
    %170 = vector.load %arg8[%c0_55, %c0_56, %c0_57] : memref<1x32x128xbf16, #tpu.memory_space<vmem>>, vector<1x32x128xbf16>
    %171 = vector.shape_cast %170 : vector<1x32x128xbf16> to vector<32x128xbf16>
    %cst_58 = arith.constant dense<0.000000e+00> : vector<16x128xf32>
    %172 = tpu.matmul %30, %171, %cst_58 {dimension_numbers = #tpu.dot_dimension_numbers<[1], [0], [0], [1], [0, 0, 1, 1], [], []>} : vector<16x32xbf16>, vector<32x128xbf16>, vector<16x128xf32> -> vector<16x128xf32>
    %cst_59 = arith.constant 5.000000e-01 : f32
    %173 = vector.broadcast %cst_59 : f32 to vector<16x128xf32>
    %174 = arith.mulf %173, %172 : vector<16x128xf32>
    %cst_60 = arith.constant 4.471500e-02 : f32
    %175 = vector.broadcast %cst_60 : f32 to vector<16x128xf32>
    %176 = arith.mulf %175, %172 : vector<16x128xf32>
    %177 = arith.mulf %176, %172 : vector<16x128xf32>
    %178 = arith.mulf %177, %172 : vector<16x128xf32>
    %179 = arith.addf %172, %178 : vector<16x128xf32>
    %cst_61 = arith.constant 0.797884583 : f32
    %180 = vector.broadcast %cst_61 : f32 to vector<16x128xf32>
    %181 = arith.mulf %180, %179 : vector<16x128xf32>
    %182 = math.tanh %181 : vector<16x128xf32>
    %cst_62 = arith.constant 1.000000e+00 : f32
    %183 = vector.broadcast %cst_62 : f32 to vector<16x128xf32>
    %184 = arith.addf %183, %182 : vector<16x128xf32>
    %185 = arith.mulf %174, %184 : vector<16x128xf32>
    %186 = arith.truncf %185 : vector<16x128xf32> to vector<16x128xbf16>
    %c0_63 = arith.constant 0 : index
    %c0_64 = arith.constant 0 : index
    %c0_65 = arith.constant 0 : index
    %187 = vector.load %arg9[%c0_63, %c0_64, %c0_65] : memref<1x128x32xbf16, #tpu.memory_space<vmem>>, vector<1x128x32xbf16>
    %188 = vector.shape_cast %187 : vector<1x128x32xbf16> to vector<128x32xbf16>
    %cst_66 = arith.constant dense<0.000000e+00> : vector<16x32xf32>
    %189 = tpu.matmul %186, %188, %cst_66 {dimension_numbers = #tpu.dot_dimension_numbers<[1], [0], [0], [1], [0, 0, 1, 1], [], []>} : vector<16x128xbf16>, vector<128x32xbf16>, vector<16x32xf32> -> vector<16x32xf32>
    %190 = arith.addf %3, %169 : vector<16x32xf32>
    %191 = arith.addf %190, %189 : vector<16x32xf32>
    %c0_67 = arith.constant 0 : index
    %c0_68 = arith.constant 0 : index
    %192 = vector.load %arg12[%c0_67, %c0_68] : memref<16x32xf32, #tpu.memory_space<vmem>>, vector<16x32xf32>
    tpu.vector_store %arg12[%c0_67, %c0_68], %191 {strides = array<i32>} : memref<16x32xf32, #tpu.memory_space<vmem>>, vector<16x32xf32>,
    %c1_i32 = arith.constant 1 : i32
    %193 = arith.cmpi eq, %arg0, %c1_i32 : i32
    %194 = arith.extui %193 : i1 to i32
    %c0_i32_69 = arith.constant 0 : i32
    %195 = arith.cmpi ne, %194, %c0_i32_69 : i32
    scf.if %195 {
      %c0_70 = arith.constant 0 : index
      %c0_71 = arith.constant 0 : index
      %196 = vector.load %arg10[%c0_70, %c0_71] : memref<1x32xf32, #tpu.memory_space<vmem>>, vector<1x32xf32>
      %c0_72 = arith.constant 0 : index
      %c0_73 = arith.constant 0 : index
      %197 = vector.load %arg11[%c0_72, %c0_73] : memref<1x32xf32, #tpu.memory_space<vmem>>, vector<1x32xf32>
      %cst_74 = arith.constant dense<0.000000e+00> : vector<16xf32>
      %198 = vector.multi_reduction <add>, %191, %cst_74 [1] : vector<16x32xf32> to vector<16xf32>
      %199 = vector.shape_cast %198 : vector<16xf32> to vector<16x1xf32>
      %cst_75 = arith.constant 3.200000e+01 : f32
      %200 = vector.broadcast %cst_75 : f32 to vector<16x1xf32>
      %201 = arith.divf %199, %200 : vector<16x1xf32>
      %202 = vector.broadcast %201 : vector<16x1xf32> to vector<16x32xf32>
      %203 = arith.subf %191, %202 : vector<16x32xf32>
      %204 = arith.mulf %203, %203 : vector<16x32xf32>
      %cst_76 = arith.constant dense<0.000000e+00> : vector<16xf32>
      %205 = vector.multi_reduction <add>, %204, %cst_76 [1] : vector<16x32xf32> to vector<16xf32>
      %206 = vector.shape_cast %205 : vector<16xf32> to vector<16x1xf32>
      %cst_77 = arith.constant 3.200000e+01 : f32
      %207 = vector.broadcast %cst_77 : f32 to vector<16x1xf32>
      %208 = arith.divf %206, %207 : vector<16x1xf32>
      %209 = vector.broadcast %201 : vector<16x1xf32> to vector<16x32xf32>
      %210 = arith.subf %191, %209 : vector<16x32xf32>
      %cst_78 = arith.constant 9.99999974E-6 : f32
      %211 = vector.broadcast %cst_78 : f32 to vector<16x1xf32>
      %212 = arith.addf %208, %211 : vector<16x1xf32>
      %213 = math.rsqrt %212 : vector<16x1xf32>
      %214 = vector.broadcast %213 : vector<16x1xf32> to vector<16x32xf32>
      %215 = arith.mulf %210, %214 : vector<16x32xf32>
      %216 = vector.broadcast %196 : vector<1x32xf32> to vector<16x32xf32>
      %217 = arith.mulf %215, %216 : vector<16x32xf32>
      %218 = vector.broadcast %197 : vector<1x32xf32> to vector<16x32xf32>
      %219 = arith.addf %217, %218 : vector<16x32xf32>
      %c0_79 = arith.constant 0 : index
      %c0_80 = arith.constant 0 : index
      %220 = vector.load %arg12[%c0_79, %c0_80] : memref<16x32xf32, #tpu.memory_space<vmem>>, vector<16x32xf32>
      tpu.vector_store %arg12[%c0_79, %c0_80], %219 {strides = array<i32>} : memref<16x32xf32, #tpu.memory_space<vmem>>, vector<16x32xf32>,
    } else {
    }
    return
  }
  func.func @transform_0(%arg0: i32) -> (i32, i32) {
    %c0_i32 = arith.constant 0 : i32
    %c0_i32_0 = arith.constant 0 : i32
    %c0_i32_1 = arith.constant 0 : i32
    return %c0_i32, %c0_i32_0 : i32, i32
  }
  func.func @transform_1(%arg0: i32) -> (i32, i32, i32) {
    %c0_i32 = arith.constant 0 : i32
    %c0_i32_0 = arith.constant 0 : i32
    %c0_i32_1 = arith.constant 0 : i32
    %c0_i32_2 = arith.constant 0 : i32
    return %c0_i32, %c0_i32_0, %c0_i32_1 : i32, i32, i32
  }
  func.func @transform_2(%arg0: i32) -> (i32, i32, i32) {
    %c0_i32 = arith.constant 0 : i32
    %c0_i32_0 = arith.constant 0 : i32
    %c0_i32_1 = arith.constant 0 : i32
    %c0_i32_2 = arith.constant 0 : i32
    return %c0_i32, %c0_i32_0, %c0_i32_1 : i32, i32, i32
  }
  func.func @transform_3(%arg0: i32) -> (i32, i32, i32) {
    %c0_i32 = arith.constant 0 : i32
    %c0_i32_0 = arith.constant 0 : i32
    %c0_i32_1 = arith.constant 0 : i32
    return %arg0, %c0_i32, %c0_i32_0 : i32, i32, i32
  }
  func.func @transform_4(%arg0: i32) -> (i32, i32, i32) {
    %c0_i32 = arith.constant 0 : i32
    %c0_i32_0 = arith.constant 0 : i32
    %c0_i32_1 = arith.constant 0 : i32
    return %arg0, %c0_i32, %c0_i32_0 : i32, i32, i32
  }
  func.func @transform_5(%arg0: i32) -> (i32, i32, i32) {
    %c0_i32 = arith.constant 0 : i32
    %c0_i32_0 = arith.constant 0 : i32
    %c0_i32_1 = arith.constant 0 : i32
    return %arg0, %c0_i32, %c0_i32_0 : i32, i32, i32
  }
  func.func @transform_6(%arg0: i32) -> (i32, i32, i32) {
    %c0_i32 = arith.constant 0 : i32
    %c0_i32_0 = arith.constant 0 : i32
    %c0_i32_1 = arith.constant 0 : i32
    return %arg0, %c0_i32, %c0_i32_0 : i32, i32, i32
  }
  func.func @transform_7(%arg0: i32) -> (i32, i32, i32) {
    %c0_i32 = arith.constant 0 : i32
    %c0_i32_0 = arith.constant 0 : i32
    %c0_i32_1 = arith.constant 0 : i32
    return %arg0, %c0_i32, %c0_i32_0 : i32, i32, i32
  }
  func.func @transform_8(%arg0: i32) -> (i32, i32, i32) {
    %c0_i32 = arith.constant 0 : i32
    %c0_i32_0 = arith.constant 0 : i32
    %c0_i32_1 = arith.constant 0 : i32
    return %arg0, %c0_i32, %c0_i32_0 : i32, i32, i32
  }
  func.func @transform_9(%arg0: i32) -> (i32, i32) {
    %c0_i32 = arith.constant 0 : i32
    %c0_i32_0 = arith.constant 0 : i32
    %c0_i32_1 = arith.constant 0 : i32
    return %c0_i32, %c0_i32_0 : i32, i32
  }
  func.func @transform_10(%arg0: i32) -> (i32, i32) {
    %c0_i32 = arith.constant 0 : i32
    %c0_i32_0 = arith.constant 0 : i32
    %c0_i32_1 = arith.constant 0 : i32
    return %c0_i32, %c0_i32_0 : i32, i32
  }
  func.func @transform_11(%arg0: i32) -> (i32, i32) {
    %c0_i32 = arith.constant 0 : i32
    %c0_i32_0 = arith.constant 0 : i32
    %c0_i32_1 = arith.constant 0 : i32
    return %c0_i32, %c0_i32_0 : i32, i32
  }
}

</mosaic_0001>

<llo_original>
// kernel: falcon_forward.1
$region0: #{falcon_forward.1}
  #allocation0 [shape = 'u32[]', space=smem, size = 0x4, offset = 0x4, fixed_abs, tag = 'smem constant byte address 0x4 - core index']
  #allocation1 [shape = 'u32[72,128]{1,0:T(1,128)}', space=vmem, size = 0x9000, scoped, tag = 'internal scratch']
  %s0 = inlined_call_operand.vmem [shape: f32[16,32], index: 0, kind: input, shape index: {}]
  %s1 = inlined_call_operand.vmem [shape: f32[8,1,8], index: 1, kind: input, shape index: {}]
  %s2 = inlined_call_operand.vmem [shape: f32[8,1,8], index: 2, kind: input, shape index: {}]
  %s3 = inlined_call_operand.vmem [shape: f32[2,1,32], index: 3, kind: input, shape index: {}]
  %s4 = inlined_call_operand.vmem [shape: f32[2,1,32], index: 4, kind: input, shape index: {}]
  %s5 = inlined_call_operand.vmem [shape: bf16[2,32,96], index: 5, kind: input, shape index: {}]
  %s6 = inlined_call_operand.vmem [shape: bf16[2,32,32], index: 6, kind: input, shape index: {}]
  %s7 = inlined_call_operand.vmem [shape: bf16[2,32,128], index: 7, kind: input, shape index: {}]
  %s8 = inlined_call_operand.vmem [shape: bf16[2,128,32], index: 8, kind: input, shape index: {}]
  %s9 = inlined_call_operand.vmem [shape: f32[1,32], index: 9, kind: input, shape index: {}]
  %s10 = inlined_call_operand.vmem [shape: f32[1,32], index: 10, kind: input, shape index: {}]
  %s11 = inlined_call_operand.hbm [shape: f32[16,32], index: 11, kind: output, shape index: {}]
  %s12 = sld [smem:[#allocation0]]
  $region85: #{falcon_forward.1} parent=0
    _
  %s14 = ssub.s32 1, %s12
  %s15 = scalar_select 0, %s14, %s12
  $region1: #{falcon_forward.1} parent=0
    #allocation2 [shape = 'u8[8192]{0}', space=vmem, size = 0x2000, scoped, tag = 'output window, operand 0, single buffered']
    #allocation3 [shape = 's32[2]{0}', space=sflag, size = 0x8, scoped, tag = 'scoped memory for falcon_forward.1']
    %16 = vsyncpa [#allocation3], 0
    loop: start=0, step=1, limit=4
    $region2: #{falcon_forward.1} parent=1 // loop_pre_header
      _
    $region3: #{falcon_forward.1} parent=1 // loop_header
      %s18 = sphi 0, %s22
      %p19 = scmp.ge.s32.totalorder %s18, 4
      %s26 = sphi 0, %s26
      %s28 = sphi 0, %s26
      %s29 = sphi 0, %s28
      %s43 = sphi 0, %s29
      %s47 = sphi 0, %s47
      %s49 = sphi 0, %s47
      %s50 = sphi 0, %s49
      %s64 = sphi 0, %s50
      %s68 = sphi 0, %s68
      %s70 = sphi 0, %s68
      %s71 = sphi 0, %s70
      %s85 = sphi 0, %s71
      %s91 = sphi 0, %s93
      %s94 = sphi 0, %s91
      %s95 = sphi 0, %s94
      %s111 = sphi 0, %s95
      %s117 = sphi 0, %s119
      %s120 = sphi 0, %s117
      %s121 = sphi 0, %s120
      %s137 = sphi 0, %s121
      %s143 = sphi 0, %s145
      %s146 = sphi 0, %s143
      %s147 = sphi 0, %s146
      %s163 = sphi 0, %s147
      %s169 = sphi 0, %s171
      %s172 = sphi 0, %s169
      %s173 = sphi 0, %s172
      %s189 = sphi 0, %s173
      %s195 = sphi 0, %s197
      %s198 = sphi 0, %s195
      %s199 = sphi 0, %s198
      %s215 = sphi 0, %s199
      %s221 = sphi 0, %s223
      %s224 = sphi 0, %s221
      %s225 = sphi 0, %s224
      %s241 = sphi 0, %s225
      %s245 = sphi 0, %s245
      %s247 = sphi 0, %s245
      %s248 = sphi 0, %s247
      %s262 = sphi 0, %s248
      %s266 = sphi 0, %s266
      %s268 = sphi 0, %s266
      %s269 = sphi 0, %s268
      %s283 = sphi 0, %s269
      %s287 = sphi 0, %s287
      %s289 = sphi 0, %s287
      %s290 = sphi 0, %s289
      %s304 = sphi 0, %s290
    $region4: #{falcon_forward.1} parent=1 // loop_header_branch
      %21 = sbr.rel (%p19) target = $region8
    $region5: #{falcon_forward.1} parent=1 // loop_body
      %s23 = ssub.s32 %s18, 1
      %s24 = ssub.s32 %s18, 2
      %s25 = sadd.s32 %s18, 1
      %s27 = sadd.s32 %s26, 1
      %p30 = scmp.eq.s32.totalorder %s18, 1
      %p31 = scmp.ne.s32.totalorder %s26, %s28
      %p32 = scmp.eq.s32.totalorder %s18, 0
      %p33 = por %p31, %p32
      %p34 = scmp.ne.s32.totalorder %s26, %s28
      %p35 = scmp.eq.s32.totalorder %s23, 1
      %p36 = por %p34, %p35
      %p37 = scmp.ne.s32.totalorder %s28, %s29
      %p38 = scmp.eq.s32.totalorder %s23, 0
      %p39 = por %p37, %p38
      %p40 = scmp.ne.s32.totalorder %s28, %s29
      %p41 = scmp.eq.s32.totalorder %s24, 1
      %p42 = por %p40, %p41
      %p44 = scmp.ne.s32.totalorder %s29, %s43
      %p45 = scmp.eq.s32.totalorder %s24, 0
      %p46 = por %p44, %p45
      %s48 = sadd.s32 %s47, 1
      %p51 = scmp.eq.s32.totalorder %s18, 1
      %p52 = scmp.ne.s32.totalorder %s47, %s49
      %p53 = scmp.eq.s32.totalorder %s18, 0
      %p54 = por %p52, %p53
      %p55 = scmp.ne.s32.totalorder %s47, %s49
      %p56 = scmp.eq.s32.totalorder %s23, 1
      %p57 = por %p55, %p56
      %p58 = scmp.ne.s32.totalorder %s49, %s50
      %p59 = scmp.eq.s32.totalorder %s23, 0
      %p60 = por %p58, %p59
      %p61 = scmp.ne.s32.totalorder %s49, %s50
      %p62 = scmp.eq.s32.totalorder %s24, 1
      %p63 = por %p61, %p62
      %p65 = scmp.ne.s32.totalorder %s50, %s64
      %p66 = scmp.eq.s32.totalorder %s24, 0
      %p67 = por %p65, %p66
      %s69 = sadd.s32 %s68, 1
      %p72 = scmp.eq.s32.totalorder %s18, 1
      %p73 = scmp.ne.s32.totalorder %s68, %s70
      %p74 = scmp.eq.s32.totalorder %s18, 0
      %p75 = por %p73, %p74
      %p76 = scmp.ne.s32.totalorder %s68, %s70
      %p77 = scmp.eq.s32.totalorder %s23, 1
      %p78 = por %p76, %p77
      %p79 = scmp.ne.s32.totalorder %s70, %s71
      %p80 = scmp.eq.s32.totalorder %s23, 0
      %p81 = por %p79, %p80
      %p82 = scmp.ne.s32.totalorder %s70, %s71
      %p83 = scmp.eq.s32.totalorder %s24, 1
      %p84 = por %p82, %p83
      %p86 = scmp.ne.s32.totalorder %s71, %s85
      %p87 = scmp.eq.s32.totalorder %s24, 0
      %p88 = por %p86, %p87
      %s89 = ssub.s32 %s18, %s25
      %p90 = scmp.eq.s32.totalorder %s89, 0
      %s92 = sadd.s32 %s91, 1
      %s93 = scalar_select %p90, %s91, %s92
      %p96 = pneg %p90
      %p97 = scmp.eq.s32.totalorder %s18, 1
      %p98 = por %p96, %p97
      %p99 = scmp.ne.s32.totalorder %s91, %s94
      %p100 = scmp.eq.s32.totalorder %s18, 0
      %p101 = por %p99, %p100
      %p102 = scmp.ne.s32.totalorder %s91, %s94
      %p103 = scmp.eq.s32.totalorder %s23, 1
      %p104 = por %p102, %p103
      %p105 = scmp.ne.s32.totalorder %s94, %s95
      %p106 = scmp.eq.s32.totalorder %s23, 0
      %p107 = por %p105, %p106
      %p108 = scmp.ne.s32.totalorder %s94, %s95
      %p109 = scmp.eq.s32.totalorder %s24, 1
      %p110 = por %p108, %p109
      %p112 = scmp.ne.s32.totalorder %s95, %s111
      %p113 = scmp.eq.s32.totalorder %s24, 0
      %p114 = por %p112, %p113
      %s115 = ssub.s32 %s18, %s25
      %p116 = scmp.eq.s32.totalorder %s115, 0
      %s118 = sadd.s32 %s117, 1
      %s119 = scalar_select %p116, %s117, %s118
      %p122 = pneg %p116
      %p123 = scmp.eq.s32.totalorder %s18, 1
      %p124 = por %p122, %p123
      %p125 = scmp.ne.s32.totalorder %s117, %s120
      %p126 = scmp.eq.s32.totalorder %s18, 0
      %p127 = por %p125, %p126
      %p128 = scmp.ne.s32.totalorder %s117, %s120
      %p129 = scmp.eq.s32.totalorder %s23, 1
      %p130 = por %p128, %p129
      %p131 = scmp.ne.s32.totalorder %s120, %s121
      %p132 = scmp.eq.s32.totalorder %s23, 0
      %p133 = por %p131, %p132
      %p134 = scmp.ne.s32.totalorder %s120, %s121
      %p135 = scmp.eq.s32.totalorder %s24, 1
      %p136 = por %p134, %p135
      %p138 = scmp.ne.s32.totalorder %s121, %s137
      %p139 = scmp.eq.s32.totalorder %s24, 0
      %p140 = por %p138, %p139
      %s141 = ssub.s32 %s18, %s25
      %p142 = scmp.eq.s32.totalorder %s141, 0
      %s144 = sadd.s32 %s143, 1
      %s145 = scalar_select %p142, %s143, %s144
      %p148 = pneg %p142
      %p149 = scmp.eq.s32.totalorder %s18, 1
      %p150 = por %p148, %p149
      %p151 = scmp.ne.s32.totalorder %s143, %s146
      %p152 = scmp.eq.s32.totalorder %s18, 0
      %p153 = por %p151, %p152
      %p154 = scmp.ne.s32.totalorder %s143, %s146
      %p155 = scmp.eq.s32.totalorder %s23, 1
      %p156 = por %p154, %p155
      %p157 = scmp.ne.s32.totalorder %s146, %s147
      %p158 = scmp.eq.s32.totalorder %s23, 0
      %p159 = por %p157, %p158
      %p160 = scmp.ne.s32.totalorder %s146, %s147
      %p161 = scmp.eq.s32.totalorder %s24, 1
      %p162 = por %p160, %p161
      %p164 = scmp.ne.s32.totalorder %s147, %s163
      %p165 = scmp.eq.s32.totalorder %s24, 0
      %p166 = por %p164, %p165
      %s167 = ssub.s32 %s18, %s25
      %p168 = scmp.eq.s32.totalorder %s167, 0
      %s170 = sadd.s32 %s169, 1
      %s171 = scalar_select %p168, %s169, %s170
      %p174 = pneg %p168
      %p175 = scmp.eq.s32.totalorder %s18, 1
      %p176 = por %p174, %p175
      %p177 = scmp.ne.s32.totalorder %s169, %s172
      %p178 = scmp.eq.s32.totalorder %s18, 0
      %p179 = por %p177, %p178
      %p180 = scmp.ne.s32.totalorder %s169, %s172
      %p181 = scmp.eq.s32.totalorder %s23, 1
      %p182 = por %p180, %p181
      %p183 = scmp.ne.s32.totalorder %s172, %s173
      %p184 = scmp.eq.s32.totalorder %s23, 0
      %p185 = por %p183, %p184
      %p186 = scmp.ne.s32.totalorder %s172, %s173
      %p187 = scmp.eq.s32.totalorder %s24, 1
      %p188 = por %p186, %p187
      %p190 = scmp.ne.s32.totalorder %s173, %s189
      %p191 = scmp.eq.s32.totalorder %s24, 0
      %p192 = por %p190, %p191
      %s193 = ssub.s32 %s18, %s25
      %p194 = scmp.eq.s32.totalorder %s193, 0
      %s196 = sadd.s32 %s195, 1
      %s197 = scalar_select %p194, %s195, %s196
      %p200 = pneg %p194
      %p201 = scmp.eq.s32.totalorder %s18, 1
      %p202 = por %p200, %p201
      %p203 = scmp.ne.s32.totalorder %s195, %s198
      %p204 = scmp.eq.s32.totalorder %s18, 0
      %p205 = por %p203, %p204
      %p206 = scmp.ne.s32.totalorder %s195, %s198
      %p207 = scmp.eq.s32.totalorder %s23, 1
      %p208 = por %p206, %p207
      %p209 = scmp.ne.s32.totalorder %s198, %s199
      %p210 = scmp.eq.s32.totalorder %s23, 0
      %p211 = por %p209, %p210
      %p212 = scmp.ne.s32.totalorder %s198, %s199
      %p213 = scmp.eq.s32.totalorder %s24, 1
      %p214 = por %p212, %p213
      %p216 = scmp.ne.s32.totalorder %s199, %s215
      %p217 = scmp.eq.s32.totalorder %s24, 0
      %p218 = por %p216, %p217
      %s219 = ssub.s32 %s18, %s25
      %p220 = scmp.eq.s32.totalorder %s219, 0
      %s222 = sadd.s32 %s221, 1
      %s223 = scalar_select %p220, %s221, %s222
      %p226 = pneg %p220
      %p227 = scmp.eq.s32.totalorder %s18, 1
      %p228 = por %p226, %p227
      %p229 = scmp.ne.s32.totalorder %s221, %s224
      %p230 = scmp.eq.s32.totalorder %s18, 0
      %p231 = por %p229, %p230
      %p232 = scmp.ne.s32.totalorder %s221, %s224
      %p233 = scmp.eq.s32.totalorder %s23, 1
      %p234 = por %p232, %p233
      %p235 = scmp.ne.s32.totalorder %s224, %s225
      %p236 = scmp.eq.s32.totalorder %s23, 0
      %p237 = por %p235, %p236
      %p238 = scmp.ne.s32.totalorder %s224, %s225
      %p239 = scmp.eq.s32.totalorder %s24, 1
      %p240 = por %p238, %p239
      %p242 = scmp.ne.s32.totalorder %s225, %s241
      %p243 = scmp.eq.s32.totalorder %s24, 0
      %p244 = por %p242, %p243
      %s246 = sadd.s32 %s245, 1
      %p249 = scmp.eq.s32.totalorder %s18, 1
      %p250 = scmp.ne.s32.totalorder %s245, %s247
      %p251 = scmp.eq.s32.totalorder %s18, 0
      %p252 = por %p250, %p251
      %p253 = scmp.ne.s32.totalorder %s245, %s247
      %p254 = scmp.eq.s32.totalorder %s23, 1
      %p255 = por %p253, %p254
      %p256 = scmp.ne.s32.totalorder %s247, %s248
      %p257 = scmp.eq.s32.totalorder %s23, 0
      %p258 = por %p256, %p257
      %p259 = scmp.ne.s32.totalorder %s247, %s248
      %p260 = scmp.eq.s32.totalorder %s24, 1
      %p261 = por %p259, %p260
      %p263 = scmp.ne.s32.totalorder %s248, %s262
      %p264 = scmp.eq.s32.totalorder %s24, 0
      %p265 = por %p263, %p264
      %s267 = sadd.s32 %s266, 1
      %p270 = scmp.eq.s32.totalorder %s18, 1
      %p271 = scmp.ne.s32.totalorder %s266, %s268
      %p272 = scmp.eq.s32.totalorder %s18, 0
      %p273 = por %p271, %p272
      %p274 = scmp.ne.s32.totalorder %s266, %s268
      %p275 = scmp.eq.s32.totalorder %s23, 1
      %p276 = por %p274, %p275
      %p277 = scmp.ne.s32.totalorder %s268, %s269
      %p278 = scmp.eq.s32.totalorder %s23, 0
      %p279 = por %p277, %p278
      %p280 = scmp.ne.s32.totalorder %s268, %s269
      %p281 = scmp.eq.s32.totalorder %s24, 1
      %p282 = por %p280, %p281
      %p284 = scmp.ne.s32.totalorder %s269, %s283
      %p285 = scmp.eq.s32.totalorder %s24, 0
      %p286 = por %p284, %p285
      %s288 = sadd.s32 %s287, 1
      %p291 = scmp.eq.s32.totalorder %s18, 1
      %p292 = scmp.ne.s32.totalorder %s287, %s289
      %p293 = scmp.eq.s32.totalorder %s18, 0
      %p294 = por %p292, %p293
      %p295 = scmp.ne.s32.totalorder %s287, %s289
      %p296 = scmp.eq.s32.totalorder %s23, 1
      %p297 = por %p295, %p296
      %p298 = scmp.ne.s32.totalorder %s289, %s290
      %p299 = scmp.eq.s32.totalorder %s23, 0
      %p300 = por %p298, %p299
      %p301 = scmp.ne.s32.totalorder %s289, %s290
      %p302 = scmp.eq.s32.totalorder %s24, 1
      %p303 = por %p301, %p302
      %p305 = scmp.ne.s32.totalorder %s290, %s304
      %p306 = scmp.eq.s32.totalorder %s24, 0
      %p307 = por %p305, %p306
      %p308 = scmp.le.s32.totalorder 1, %s18
      %p309 = scmp.lt.s32.totalorder %s18, 3
      %p310 = pnand %p308, %p309
      %p311 = pneg %p310
      // Predicated region
      $region9: #{falcon_forward.1} parent=5 // pred_check
        _
      $region10: #{falcon_forward.1} parent=5 // pred_check_branch
        %313 = sbr.rel (%p310) target = $region12
      $region11: #{falcon_forward.1} parent=5 // pred_region
        %s314 = ssub.s32 %s18, 1
        // Predicated region
        $region13: #{falcon_forward.1} parent=11 // pred_check
          %p315 = pneg %p39
        $region14: #{falcon_forward.1} parent=11 // pred_check_branch
          %317 = sbr.rel (%p315) target = $region16
        $region15: #{falcon_forward.1} parent=11 // pred_region
          _
        $region16: #{falcon_forward.1} parent=11 // pred_fallthru
          _
        // Predicated region
        $region17: #{falcon_forward.1} parent=11 // pred_check
          %p318 = pneg %p60
        $region18: #{falcon_forward.1} parent=11 // pred_check_branch
          %320 = sbr.rel (%p318) target = $region20
        $region19: #{falcon_forward.1} parent=11 // pred_region
          _
        $region20: #{falcon_forward.1} parent=11 // pred_fallthru
          _
        // Predicated region
        $region21: #{falcon_forward.1} parent=11 // pred_check
          %p321 = pneg %p81
        $region22: #{falcon_forward.1} parent=11 // pred_check_branch
          %323 = sbr.rel (%p321) target = $region24
        $region23: #{falcon_forward.1} parent=11 // pred_region
          _
        $region24: #{falcon_forward.1} parent=11 // pred_fallthru
          _
        // Predicated region
        $region25: #{falcon_forward.1} parent=11 // pred_check
          %p324 = pneg %p258
        $region26: #{falcon_forward.1} parent=11 // pred_check_branch
          %326 = sbr.rel (%p324) target = $region28
        $region27: #{falcon_forward.1} parent=11 // pred_region
          _
        $region28: #{falcon_forward.1} parent=11 // pred_fallthru
          _
        // Predicated region
        $region29: #{falcon_forward.1} parent=11 // pred_check
          %p327 = pneg %p279
        $region30: #{falcon_forward.1} parent=11 // pred_check_branch
          %329 = sbr.rel (%p327) target = $region32
        $region31: #{falcon_forward.1} parent=11 // pred_region
          _
        $region32: #{falcon_forward.1} parent=11 // pred_fallthru
          _
      $region12: #{falcon_forward.1} parent=5 // pred_fallthru
        _
      %p330 = scmp.lt.s32.totalorder %s18, 2
      // Predicated region
      $region33: #{falcon_forward.1} parent=5 // pred_check
        %p331 = pneg %p330
      $region34: #{falcon_forward.1} parent=5 // pred_check_branch
        %333 = sbr.rel (%p331) target = $region36
      $region35: #{falcon_forward.1} parent=5 // pred_region
        // Predicated region
        $region37: #{falcon_forward.1} parent=35 // pred_check
          %p334 = pneg %p101
        $region38: #{falcon_forward.1} parent=35 // pred_check_branch
          %336 = sbr.rel (%p334) target = $region40
        $region39: #{falcon_forward.1} parent=35 // pred_region
          %p337 = scmp.lt.s32.totalorder %s18, 1
          %s338 = scalar_select %p337, %s18, 1
          %s339 = scalar_lea.vmem %s3, %s338
        $region40: #{falcon_forward.1} parent=35 // pred_fallthru
          _
        // Predicated region
        $region41: #{falcon_forward.1} parent=35 // pred_check
          %p340 = pneg %p127
        $region42: #{falcon_forward.1} parent=35 // pred_check_branch
          %342 = sbr.rel (%p340) target = $region44
        $region43: #{falcon_forward.1} parent=35 // pred_region
          %p343 = scmp.lt.s32.totalorder %s18, 1
          %s344 = scalar_select %p343, %s18, 1
          %s345 = scalar_lea.vmem %s4, %s344
        $region44: #{falcon_forward.1} parent=35 // pred_fallthru
          _
        // Predicated region
        $region45: #{falcon_forward.1} parent=35 // pred_check
          %p346 = pneg %p153
        $region46: #{falcon_forward.1} parent=35 // pred_check_branch
          %348 = sbr.rel (%p346) target = $region48
        $region47: #{falcon_forward.1} parent=35 // pred_region
          %p349 = scmp.lt.s32.totalorder %s18, 1
          %s350 = scalar_select %p349, %s18, 1
          %s351 = smul.addr %s350, 4
          %s352 = smul.addr %s351, 4
          %s353 = scalar_lea.vmem %s5, %s352
        $region48: #{falcon_forward.1} parent=35 // pred_fallthru
          _
        // Predicated region
        $region49: #{falcon_forward.1} parent=35 // pred_check
          %p354 = pneg %p179
        $region50: #{falcon_forward.1} parent=35 // pred_check_branch
          %356 = sbr.rel (%p354) target = $region52
        $region51: #{falcon_forward.1} parent=35 // pred_region
          %p357 = scmp.lt.s32.totalorder %s18, 1
          %s358 = scalar_select %p357, %s18, 1
          %s359 = smul.addr %s358, 4
          %s360 = smul.addr %s359, 4
          %s361 = scalar_lea.vmem %s6, %s360
        $region52: #{falcon_forward.1} parent=35 // pred_fallthru
          _
        // Predicated region
        $region53: #{falcon_forward.1} parent=35 // pred_check
          %p362 = pneg %p205
        $region54: #{falcon_forward.1} parent=35 // pred_check_branch
          %364 = sbr.rel (%p362) target = $region56
        $region55: #{falcon_forward.1} parent=35 // pred_region
          %p365 = scmp.lt.s32.totalorder %s18, 1
          %s366 = scalar_select %p365, %s18, 1
          %s367 = smul.addr %s366, 4
          %s368 = smul.addr %s367, 4
          %s369 = scalar_lea.vmem %s7, %s368
        $region56: #{falcon_forward.1} parent=35 // pred_fallthru
          _
        // Predicated region
        $region57: #{falcon_forward.1} parent=35 // pred_check
          %p370 = pneg %p231
        $region58: #{falcon_forward.1} parent=35 // pred_check_branch
          %372 = sbr.rel (%p370) target = $region60
        $region59: #{falcon_forward.1} parent=35 // pred_region
          %p373 = scmp.lt.s32.totalorder %s18, 1
          %s374 = scalar_select %p373, %s18, 1
          %s375 = smul.addr %s374, 16
          %s376 = smul.addr %s375, 4
          %s377 = scalar_lea.vmem %s8, %s376
        $region60: #{falcon_forward.1} parent=35 // pred_fallthru
          _
      $region36: #{falcon_forward.1} parent=5 // pred_fallthru
        _
      %p378 = scmp.le.s32.totalorder 1, %s18
      %p379 = scmp.lt.s32.totalorder %s18, 3
      %p380 = pnand %p378, %p379
      %p381 = pneg %p380
      // Predicated region
      $region61: #{falcon_forward.1} parent=5 // pred_check
        _
      $region62: #{falcon_forward.1} parent=5 // pred_check_branch
        %383 = sbr.rel (%p380) target = $region64
      $region63: #{falcon_forward.1} parent=5 // pred_region
        %s384 = ssub.s32 %s18, 1
        %p385 = pneg %p39
        %p386 = pneg %p36
        %p387 = pneg %p60
        %p388 = pneg %p57
        %p389 = pneg %p81
        %p390 = pneg %p78
        %p391 = scmp.lt.s32.totalorder %s23, 1
        %s392 = scalar_select %p391, %s23, 1
        %s393 = scalar_lea.vmem %s3, %s392
        %p394 = pneg %p107
        %p395 = pneg %p104
        %p396 = scmp.lt.s32.totalorder %s23, 1
        %s397 = scalar_select %p396, %s23, 1
        %s398 = scalar_lea.vmem %s4, %s397
        %p399 = pneg %p133
        %p400 = pneg %p130
        %p401 = scmp.lt.s32.totalorder %s23, 1
        %s402 = scalar_select %p401, %s23, 1
        %s403 = smul.addr %s402, 4
        %s404 = smul.addr %s403, 4
        %s405 = scalar_lea.vmem %s5, %s404
        %p406 = pneg %p159
        %p407 = pneg %p156
        %p408 = scmp.lt.s32.totalorder %s23, 1
        %s409 = scalar_select %p408, %s23, 1
        %s410 = smul.addr %s409, 4
        %s411 = smul.addr %s410, 4
        %s412 = scalar_lea.vmem %s6, %s411
        %p413 = pneg %p185
        %p414 = pneg %p182
        %p415 = scmp.lt.s32.totalorder %s23, 1
        %s416 = scalar_select %p415, %s23, 1
        %s417 = smul.addr %s416, 4
        %s418 = smul.addr %s417, 4
        %s419 = scalar_lea.vmem %s7, %s418
        %p420 = pneg %p211
        %p421 = pneg %p208
        %p422 = scmp.lt.s32.totalorder %s23, 1
        %s423 = scalar_select %p422, %s23, 1
        %s424 = smul.addr %s423, 16
        %s425 = smul.addr %s424, 4
        %s426 = scalar_lea.vmem %s8, %s425
        %p427 = pneg %p237
        %p428 = pneg %p234
        %p429 = pneg %p258
        %p430 = pneg %p255
        %p431 = pneg %p279
        %p432 = pneg %p276
        %p433 = pneg %p300
        %p434 = pneg %p297
        %p435 = scmp.lt.s32.totalorder %s23, 1
        %s436 = scalar_select %p435, %s23, 1
        %s437 = scalar_lea.vmem %s3, %s436
        %p438 = scmp.lt.s32.totalorder %s23, 1
        %s439 = scalar_select %p438, %s23, 1
        %s440 = scalar_lea.vmem %s4, %s439
        %p441 = scmp.lt.s32.totalorder %s23, 1
        %s442 = scalar_select %p441, %s23, 1
        %s443 = smul.addr %s442, 4
        %s444 = smul.addr %s443, 4
        %s445 = scalar_lea.vmem %s5, %s444
        %p446 = scmp.lt.s32.totalorder %s23, 1
        %s447 = scalar_select %p446, %s23, 1
        %s448 = smul.addr %s447, 4
        %s449 = smul.addr %s448, 4
        %s450 = scalar_lea.vmem %s6, %s449
        %p451 = scmp.lt.s32.totalorder %s23, 1
        %s452 = scalar_select %p451, %s23, 1
        %s453 = smul.addr %s452, 4
        %s454 = smul.addr %s453, 4
        %s455 = scalar_lea.vmem %s7, %s454
        %p456 = scmp.lt.s32.totalorder %s23, 1
        %s457 = scalar_select %p456, %s23, 1
        %s458 = smul.addr %s457, 16
        %s459 = smul.addr %s458, 4
        %s460 = scalar_lea.vmem %s8, %s459
        %p462 = scmp.eq.s32.totalorder %s23, 0
        // Predicated region
        $region65: #{falcon_forward.1} parent=63 // pred_check
          %p463 = pneg %p462
        $region66: #{falcon_forward.1} parent=63 // pred_check_branch
          %465 = sbr.rel (%p463) target = $region68
        $region67: #{falcon_forward.1} parent=63 // pred_region
          %v466 = vld [vmem:[%s0] sm:$0xff]
          %v467 = vld [vmem:[%s0 + $0x8] sm:$0xff]
          %vm468 = vcmask 261120
          %469 = vst.msk [vmem:[#allocation2] sm:$0xff] %vm468, %v466
          %470 = vst.msk [vmem:[#allocation2 + $0x8] sm:$0xff] %vm468, %v467
        $region68: #{falcon_forward.1} parent=63 // pred_fallthru
          _
        %v471 = vld [vmem:[#allocation2] sm:$0xff]
        %v472 = vld [vmem:[#allocation2 + $0x8] sm:$0xff]
        %v473 = vld [vmem:[%s437] sm:$0x1]
        %v474 = vld [vmem:[%s440] sm:$0x1]
        %vm475 = vcmask 261120
        %v476 = vsel %vm475, %v471, 0.0
        %477 = vadd.xlane.f32.xlu0 %v476
        %v478 = vpop.xlane.xlu0 %477
        %v479 = vsel %vm475, %v472, 0.0
        %480 = vadd.xlane.f32.xlu0 %v479
        %v481 = vpop.xlane.xlu0 %480
        %v482 = vrcp.pop 32.0
        %v483 = vmul.f32 32.0, %v482
        %v484 = vsub.f32 1.0, %v483
        %v485 = vmul.f32 %v482, %v484
        %v486 = vadd.f32 %v482, %v485
        %vm487 = vweird.f32 %v482
        %v488 = vsel %vm487, %v482, %v486
        %v489 = vmul.f32 %v478, %v488
        %v490 = vmul.f32 %v481, %v488
        %v491 = vsub.f32 %v471, %v489
        %v492 = vsub.f32 %v472, %v490
        %v493 = vmul.f32 %v491, %v491
        %v494 = vmul.f32 %v492, %v492
        %v495 = vsel %vm475, %v493, 0.0
        %496 = vadd.xlane.f32.xlu0 %v495
        %v497 = vpop.xlane.xlu0 %496
        %v498 = vsel %vm475, %v494, 0.0
        %499 = vadd.xlane.f32.xlu0 %v498
        %v500 = vpop.xlane.xlu0 %499
        %v501 = vmul.f32 %v497, %v488
        %v502 = vmul.f32 %v500, %v488
        %v503 = vadd.f32 %v501, 1e-05
        %v504 = vadd.f32 %v502, 1e-05
        %v505 = vrsqrt.pop %v503
        %v506 = vmul.f32 %v505, %v503
        %v507 = vmul.f32 %v506, %v505
        %v508 = vmul.f32 0.5, %v507
        %v509 = vsub.f32 1.5, %v508
        %v510 = vmul.f32 %v505, %v509
        %vm511 = vweird.f32 %v503
        %vm512 = vweird.f32 %v505
        %vm513 = vmor %vm511, %vm512
        %v514 = vsel %vm513, %v505, %v510
        %v515 = vrsqrt.pop %v504
        %v516 = vmul.f32 %v515, %v504
        %v517 = vmul.f32 %v516, %v515
        %v518 = vmul.f32 0.5, %v517
        %v519 = vsub.f32 1.5, %v518
        %v520 = vmul.f32 %v515, %v519
        %vm521 = vweird.f32 %v504
        %vm522 = vweird.f32 %v515
        %vm523 = vmor %vm521, %vm522
        %v524 = vsel %vm523, %v515, %v520
        %v525 = vmul.f32 %v491, %v514
        %v526 = vmul.f32 %v492, %v524
        %v528 = vperm.slane %v473, 0
        %v530 = vmul.f32 %v525, %v528
        %v531 = vmul.f32 %v526, %v528
        %v533 = vperm.slane %v474, 0
        %v535 = vadd.f32 %v530, %v533
        %v536 = vadd.f32 %v531, %v533
        %v537 = vpack.c.bf16 %v536, %v535
        %v538 = vld [vmem:[%s445] sm:$0xf]
        %v539 = vld [vmem:[%s445 + $0x4] sm:$0xf]
        %v540 = vld [vmem:[%s445 + $0x8] sm:$0xf]
        %v541 = vld [vmem:[%s445 + $0xc] sm:$0xf]
        %v546 = vunpack.c.l.b16 %v538
        %v547 = vunpack.c.l.b16 %v539
        %v548 = vunpack.c.l.b16 %v540
        %v549 = vunpack.c.l.b16 %v541
        %v550 = vpack.c.b16 %v547, %v546
        %v551 = vpack.c.b16 %v549, %v548
        %v555 = vsel %vm475, %v537, 0
        %557 = vmatpush.bf16.msra.mxu0 0
        %558 = vmatpush.bf16.msra.mxu0 0
        %559 = vmatpush.bf16.msra.mxu0 0
        %560 = vmatpush.bf16.msra.mxu0 0
        %561 = vmatpush.bf16.msra.mxu0 0
        %562 = vmatpush.bf16.msra.mxu0 0
        %563 = vmatpush.bf16.msra.mxu0 %v551
        %564 = vmatpush.bf16.msra.mxu0 %v550
        %565 = vmatmul.bf16.gmra.mxu0 %v555
        %v566 = vpop.f32.mrf.mxu0
        %v567 = vadd.f32 0.0, %v566
        %v568 = vpop.f32.mrf.mxu0
        %v569 = vadd.f32 0.0, %v568
        %570 = vdwg.mxu0
        %573 = vrot.lane.b32.xlu0 %v567, 120
        %v574 = vpop.permute.xlu0 %573
        %575 = vrot.lane.b32.xlu0 %v569, 120
        %v576 = vpop.permute.xlu0 %575
        %579 = vrot.lane.b32.xlu0 %v567, 112
        %v580 = vpop.permute.xlu0 %579
        %581 = vrot.lane.b32.xlu0 %v569, 112
        %v582 = vpop.permute.xlu0 %581
        %585 = vrot.lane.b32.xlu0 %v567, 104
        %v586 = vpop.permute.xlu0 %585
        %587 = vrot.lane.b32.xlu0 %v569, 104
        %v588 = vpop.permute.xlu0 %587
        %591 = vrot.lane.b32.xlu0 %v567, 96
        %v592 = vpop.permute.xlu0 %591
        %593 = vrot.lane.b32.xlu0 %v569, 96
        %v594 = vpop.permute.xlu0 %593
        %597 = vrot.lane.b32.xlu0 %v567, 88
        %v598 = vpop.permute.xlu0 %597
        %599 = vrot.lane.b32.xlu0 %v569, 88
        %v600 = vpop.permute.xlu0 %599
        %603 = vrot.lane.b32.xlu0 %v567, 80
        %v604 = vpop.permute.xlu0 %603
        %605 = vrot.lane.b32.xlu0 %v569, 80
        %v606 = vpop.permute.xlu0 %605
        %609 = vrot.lane.b32.xlu0 %v567, 72
        %v610 = vpop.permute.xlu0 %609
        %611 = vrot.lane.b32.xlu0 %v569, 72
        %v612 = vpop.permute.xlu0 %611
        %615 = vrot.lane.b32.xlu0 %v567, 64
        %v616 = vpop.permute.xlu0 %615
        %617 = vrot.lane.b32.xlu0 %v569, 64
        %v618 = vpop.permute.xlu0 %617
        %621 = vrot.lane.b32.xlu0 %v567, 56
        %v622 = vpop.permute.xlu0 %621
        %623 = vrot.lane.b32.xlu0 %v569, 56
        %v624 = vpop.permute.xlu0 %623
        %627 = vrot.lane.b32.xlu0 %v567, 48
        %v628 = vpop.permute.xlu0 %627
        %629 = vrot.lane.b32.xlu0 %v569, 48
        %v630 = vpop.permute.xlu0 %629
        %633 = vrot.lane.b32.xlu0 %v567, 40
        %v634 = vpop.permute.xlu0 %633
        %635 = vrot.lane.b32.xlu0 %v569, 40
        %v636 = vpop.permute.xlu0 %635
        %v639 = vrot.slane %v580, 4
        %vm640 = vcmask 1047556
        %v641 = vsel %vm640, %v639, %v567
        %v642 = vrot.slane %v567, 4
        %v643 = vsel %vm640, %v580, %v642
        %v645 = vunpack.c.l.s4 1983009808
        %v646 = vunpack.c.0.s8 %v645
        %v647 = vperm.slane %v641, %v646
        %v649 = vunpack.c.l.s4 1983009808
        %v650 = vunpack.c.0.s8 %v649
        %v651 = vperm.slane %v643, %v650
        %v652 = vrot.slane %v586, 4
        %v653 = vsel %vm640, %v652, %v574
        %v654 = vrot.slane %v574, 4
        %v655 = vsel %vm640, %v586, %v654
        %v657 = vunpack.c.l.s4 1983009808
        %v658 = vunpack.c.0.s8 %v657
        %v659 = vperm.slane %v653, %v658
        %v661 = vunpack.c.l.s4 1983009808
        %v662 = vunpack.c.0.s8 %v661
        %v663 = vperm.slane %v655, %v662
        %v664 = vrot.slane %v604, 4
        %v665 = vsel %vm640, %v664, %v592
        %v666 = vrot.slane %v592, 4
        %v667 = vsel %vm640, %v604, %v666
        %v669 = vunpack.c.l.s4 1983009808
        %v670 = vunpack.c.0.s8 %v669
        %v671 = vperm.slane %v665, %v670
        %v673 = vunpack.c.l.s4 1983009808
        %v674 = vunpack.c.0.s8 %v673
        %v675 = vperm.slane %v667, %v674
        %v676 = vrot.slane %v610, 4
        %v677 = vsel %vm640, %v676, %v598
        %v678 = vrot.slane %v598, 4
        %v679 = vsel %vm640, %v610, %v678
        %v681 = vunpack.c.l.s4 1983009808
        %v682 = vunpack.c.0.s8 %v681
        %v683 = vperm.slane %v677, %v682
        %v685 = vunpack.c.l.s4 1983009808
        %v686 = vunpack.c.0.s8 %v685
        %v687 = vperm.slane %v679, %v686
        %v688 = vrot.slane %v659, 4
        %v689 = vsel %vm640, %v688, %v647
        %v690 = vrot.slane %v647, 4
        %v691 = vsel %vm640, %v659, %v690
        %v693 = vunpack.c.l.s4 1934713408
        %v694 = vunpack.c.0.s8 %v693
        %v695 = vperm.slane %v689, %v694
        %v697 = vunpack.c.l.s4 1934713408
        %v698 = vunpack.c.0.s8 %v697
        %v699 = vperm.slane %v691, %v698
        %v700 = vrot.slane %v663, 4
        %v701 = vsel %vm640, %v700, %v651
        %v702 = vrot.slane %v651, 4
        %v703 = vsel %vm640, %v663, %v702
        %v705 = vunpack.c.l.s4 1934713408
        %v706 = vunpack.c.0.s8 %v705
        %v707 = vperm.slane %v701, %v706
        %v709 = vunpack.c.l.s4 1934713408
        %v710 = vunpack.c.0.s8 %v709
        %v711 = vperm.slane %v703, %v710
        %v712 = vrot.slane %v683, 4
        %v713 = vsel %vm640, %v712, %v671
        %v714 = vrot.slane %v671, 4
        %v715 = vsel %vm640, %v683, %v714
        %v717 = vunpack.c.l.s4 1934713408
        %v718 = vunpack.c.0.s8 %v717
        %v719 = vperm.slane %v713, %v718
        %v721 = vunpack.c.l.s4 1934713408
        %v722 = vunpack.c.0.s8 %v721
        %v723 = vperm.slane %v715, %v722
        %v724 = vrot.slane %v687, 4
        %v725 = vsel %vm640, %v724, %v675
        %v726 = vrot.slane %v675, 4
        %v727 = vsel %vm640, %v687, %v726
        %v729 = vunpack.c.l.s4 1934713408
        %v730 = vunpack.c.0.s8 %v729
        %v731 = vperm.slane %v725, %v730
        %v733 = vunpack.c.l.s4 1934713408
        %v734 = vunpack.c.0.s8 %v733
        %v735 = vperm.slane %v727, %v734
        %v736 = vrot.slane %v719, 4
        %v737 = vsel %vm640, %v736, %v695
        %v738 = vrot.slane %v695, 4
        %v739 = vsel %vm640, %v719, %v738
        %v740 = vrot.slane %v723, 4
        %v741 = vsel %vm640, %v740, %v699
        %v742 = vrot.slane %v699, 4
        %v743 = vsel %vm640, %v723, %v742
        %v744 = vrot.slane %v731, 4
        %v745 = vsel %vm640, %v744, %v707
        %v746 = vrot.slane %v707, 4
        %v747 = vsel %vm640, %v731, %v746
        %v748 = vrot.slane %v735, 4
        %v749 = vsel %vm640, %v748, %v711
        %v750 = vrot.slane %v711, 4
        %v751 = vsel %vm640, %v735, %v750
        %v752 = vrot.slane %v628, 4
        %v753 = vsel %vm640, %v752, %v616
        %v754 = vrot.slane %v616, 4
        %v755 = vsel %vm640, %v628, %v754
        %v757 = vunpack.c.l.s4 1983009808
        %v758 = vunpack.c.0.s8 %v757
        %v759 = vperm.slane %v753, %v758
        %v761 = vunpack.c.l.s4 1983009808
        %v762 = vunpack.c.0.s8 %v761
        %v763 = vperm.slane %v755, %v762
        %v764 = vrot.slane %v634, 4
        %v765 = vsel %vm640, %v764, %v622
        %v766 = vrot.slane %v622, 4
        %v767 = vsel %vm640, %v634, %v766
        %v769 = vunpack.c.l.s4 1983009808
        %v770 = vunpack.c.0.s8 %v769
        %v771 = vperm.slane %v765, %v770
        %v773 = vunpack.c.l.s4 1983009808
        %v774 = vunpack.c.0.s8 %v773
        %v775 = vperm.slane %v767, %v774
        %v776 = vrot.slane %v771, 4
        %v777 = vsel %vm640, %v776, %v759
        %v778 = vrot.slane %v759, 4
        %v779 = vsel %vm640, %v771, %v778
        %v781 = vunpack.c.l.s4 1934713408
        %v782 = vunpack.c.0.s8 %v781
        %v783 = vperm.slane %v777, %v782
        %v785 = vunpack.c.l.s4 1934713408
        %v786 = vunpack.c.0.s8 %v785
        %v787 = vperm.slane %v779, %v786
        %v788 = vrot.slane %v775, 4
        %v789 = vsel %vm640, %v788, %v763
        %v790 = vrot.slane %v763, 4
        %v791 = vsel %vm640, %v775, %v790
        %v793 = vunpack.c.l.s4 1934713408
        %v794 = vunpack.c.0.s8 %v793
        %v795 = vperm.slane %v789, %v794
        %v797 = vunpack.c.l.s4 1934713408
        %v798 = vunpack.c.0.s8 %v797
        %v799 = vperm.slane %v791, %v798
        %v800 = vrot.slane %v783, 4
        %v801 = vsel %vm640, 0.0, %v800
        %v802 = vrot.slane %v787, 4
        %v803 = vsel %vm640, 0.0, %v802
        %v804 = vrot.slane %v795, 4
        %v805 = vsel %vm640, 0.0, %v804
        %v806 = vrot.slane %v799, 4
        %v807 = vsel %vm640, 0.0, %v806
        %v808 = vrot.slane %v582, 4
        %v809 = vsel %vm640, %v808, %v569
        %v810 = vrot.slane %v569, 4
        %v811 = vsel %vm640, %v582, %v810
        %v813 = vunpack.c.l.s4 1983009808
        %v814 = vunpack.c.0.s8 %v813
        %v815 = vperm.slane %v809, %v814
        %v817 = vunpack.c.l.s4 1983009808
        %v818 = vunpack.c.0.s8 %v817
        %v819 = vperm.slane %v811, %v818
        %v820 = vrot.slane %v588, 4
        %v821 = vsel %vm640, %v820, %v576
        %v822 = vrot.slane %v576, 4
        %v823 = vsel %vm640, %v588, %v822
        %v825 = vunpack.c.l.s4 1983009808
        %v826 = vunpack.c.0.s8 %v825
        %v827 = vperm.slane %v821, %v826
        %v829 = vunpack.c.l.s4 1983009808
        %v830 = vunpack.c.0.s8 %v829
        %v831 = vperm.slane %v823, %v830
        %v832 = vrot.slane %v606, 4
        %v833 = vsel %vm640, %v832, %v594
        %v834 = vrot.slane %v594, 4
        %v835 = vsel %vm640, %v606, %v834
        %v837 = vunpack.c.l.s4 1983009808
        %v838 = vunpack.c.0.s8 %v837
        %v839 = vperm.slane %v833, %v838
        %v841 = vunpack.c.l.s4 1983009808
        %v842 = vunpack.c.0.s8 %v841
        %v843 = vperm.slane %v835, %v842
        %v844 = vrot.slane %v612, 4
        %v845 = vsel %vm640, %v844, %v600
        %v846 = vrot.slane %v600, 4
        %v847 = vsel %vm640, %v612, %v846
        %v849 = vunpack.c.l.s4 1983009808
        %v850 = vunpack.c.0.s8 %v849
        %v851 = vperm.slane %v845, %v850
        %v853 = vunpack.c.l.s4 1983009808
        %v854 = vunpack.c.0.s8 %v853
        %v855 = vperm.slane %v847, %v854
        %v856 = vrot.slane %v827, 4
        %v857 = vsel %vm640, %v856, %v815
        %v858 = vrot.slane %v815, 4
        %v859 = vsel %vm640, %v827, %v858
        %v861 = vunpack.c.l.s4 1934713408
        %v862 = vunpack.c.0.s8 %v861
        %v863 = vperm.slane %v857, %v862
        %v865 = vunpack.c.l.s4 1934713408
        %v866 = vunpack.c.0.s8 %v865
        %v867 = vperm.slane %v859, %v866
        %v868 = vrot.slane %v831, 4
        %v869 = vsel %vm640, %v868, %v819
        %v870 = vrot.slane %v819, 4
        %v871 = vsel %vm640, %v831, %v870
        %v873 = vunpack.c.l.s4 1934713408
        %v874 = vunpack.c.0.s8 %v873
        %v875 = vperm.slane %v869, %v874
        %v877 = vunpack.c.l.s4 1934713408
        %v878 = vunpack.c.0.s8 %v877
        %v879 = vperm.slane %v871, %v878
        %v880 = vrot.slane %v851, 4
        %v881 = vsel %vm640, %v880, %v839
        %v882 = vrot.slane %v839, 4
        %v883 = vsel %vm640, %v851, %v882
        %v885 = vunpack.c.l.s4 1934713408
        %v886 = vunpack.c.0.s8 %v885
        %v887 = vperm.slane %v881, %v886
        %v889 = vunpack.c.l.s4 1934713408
        %v890 = vunpack.c.0.s8 %v889
        %v891 = vperm.slane %v883, %v890
        %v892 = vrot.slane %v855, 4
        %v893 = vsel %vm640, %v892, %v843
        %v894 = vrot.slane %v843, 4
        %v895 = vsel %vm640, %v855, %v894
        %v897 = vunpack.c.l.s4 1934713408
        %v898 = vunpack.c.0.s8 %v897
        %v899 = vperm.slane %v893, %v898
        %v901 = vunpack.c.l.s4 1934713408
        %v902 = vunpack.c.0.s8 %v901
        %v903 = vperm.slane %v895, %v902
        %v904 = vrot.slane %v887, 4
        %v905 = vsel %vm640, %v904, %v863
        %v906 = vrot.slane %v863, 4
        %v907 = vsel %vm640, %v887, %v906
        %v908 = vrot.slane %v891, 4
        %v909 = vsel %vm640, %v908, %v867
        %v910 = vrot.slane %v867, 4
        %v911 = vsel %vm640, %v891, %v910
        %v912 = vrot.slane %v899, 4
        %v913 = vsel %vm640, %v912, %v875
        %v914 = vrot.slane %v875, 4
        %v915 = vsel %vm640, %v899, %v914
        %v916 = vrot.slane %v903, 4
        %v917 = vsel %vm640, %v916, %v879
        %v918 = vrot.slane %v879, 4
        %v919 = vsel %vm640, %v903, %v918
        %v920 = vrot.slane %v630, 4
        %v921 = vsel %vm640, %v920, %v618
        %v922 = vrot.slane %v618, 4
        %v923 = vsel %vm640, %v630, %v922
        %v925 = vunpack.c.l.s4 1983009808
        %v926 = vunpack.c.0.s8 %v925
        %v927 = vperm.slane %v921, %v926
        %v929 = vunpack.c.l.s4 1983009808
        %v930 = vunpack.c.0.s8 %v929
        %v931 = vperm.slane %v923, %v930
        %v932 = vrot.slane %v636, 4
        %v933 = vsel %vm640, %v932, %v624
        %v934 = vrot.slane %v624, 4
        %v935 = vsel %vm640, %v636, %v934
        %v937 = vunpack.c.l.s4 1983009808
        %v938 = vunpack.c.0.s8 %v937
        %v939 = vperm.slane %v933, %v938
        %v941 = vunpack.c.l.s4 1983009808
        %v942 = vunpack.c.0.s8 %v941
        %v943 = vperm.slane %v935, %v942
        %v944 = vrot.slane %v939, 4
        %v945 = vsel %vm640, %v944, %v927
        %v946 = vrot.slane %v927, 4
        %v947 = vsel %vm640, %v939, %v946
        %v949 = vunpack.c.l.s4 1934713408
        %v950 = vunpack.c.0.s8 %v949
        %v951 = vperm.slane %v945, %v950
        %v953 = vunpack.c.l.s4 1934713408
        %v954 = vunpack.c.0.s8 %v953
        %v955 = vperm.slane %v947, %v954
        %v956 = vrot.slane %v943, 4
        %v957 = vsel %vm640, %v956, %v931
        %v958 = vrot.slane %v931, 4
        %v959 = vsel %vm640, %v943, %v958
        %v961 = vunpack.c.l.s4 1934713408
        %v962 = vunpack.c.0.s8 %v961
        %v963 = vperm.slane %v957, %v962
        %v965 = vunpack.c.l.s4 1934713408
        %v966 = vunpack.c.0.s8 %v965
        %v967 = vperm.slane %v959, %v966
        %v968 = vrot.slane %v951, 4
        %v969 = vsel %vm640, 0.0, %v968
        %v970 = vrot.slane %v955, 4
        %v971 = vsel %vm640, 0.0, %v970
        %v972 = vrot.slane %v963, 4
        %v973 = vsel %vm640, 0.0, %v972
        %v974 = vrot.slane %v967, 4
        %v975 = vsel %vm640, 0.0, %v974
        %v976 = vld [vmem:[%s1] sm:$0x1]
        %v977 = vld [vmem:[%s1 + $0x1] sm:$0x1]
        %v978 = vld [vmem:[%s1 + $0x2] sm:$0x1]
        %v979 = vld [vmem:[%s1 + $0x3] sm:$0x1]
        %v980 = vld [vmem:[%s1 + $0x4] sm:$0x1]
        %v981 = vld [vmem:[%s1 + $0x5] sm:$0x1]
        %v982 = vld [vmem:[%s1 + $0x6] sm:$0x1]
        %v983 = vld [vmem:[%s1 + $0x7] sm:$0x1]
        %v984 = vld [vmem:[%s2] sm:$0x1]
        %v985 = vld [vmem:[%s2 + $0x1] sm:$0x1]
        %v986 = vld [vmem:[%s2 + $0x2] sm:$0x1]
        %v987 = vld [vmem:[%s2 + $0x3] sm:$0x1]
        %v988 = vld [vmem:[%s2 + $0x4] sm:$0x1]
        %v989 = vld [vmem:[%s2 + $0x5] sm:$0x1]
        %v990 = vld [vmem:[%s2 + $0x6] sm:$0x1]
        %v991 = vld [vmem:[%s2 + $0x7] sm:$0x1]
        %v1000 = vperm.slane %v976, 0
        %v1001 = vperm.slane %v977, 0
        %v1002 = vperm.slane %v978, 0
        %v1003 = vperm.slane %v979, 0
        %v1004 = vperm.slane %v980, 0
        %v1005 = vperm.slane %v981, 0
        %v1006 = vperm.slane %v982, 0
        %v1007 = vperm.slane %v983, 0
        %v1016 = vmul.f32 %v737, %v1000
        %v1017 = vmul.f32 %v739, %v1001
        %v1018 = vmul.f32 %v741, %v1002
        %v1019 = vmul.f32 %v743, %v1003
        %v1020 = vmul.f32 %v745, %v1004
        %v1021 = vmul.f32 %v747, %v1005
        %v1022 = vmul.f32 %v749, %v1006
        %v1023 = vmul.f32 %v751, %v1007
        %v1024 = vmul.f32 %v905, %v1000
        %v1025 = vmul.f32 %v907, %v1001
        %v1026 = vmul.f32 %v909, %v1002
        %v1027 = vmul.f32 %v911, %v1003
        %v1028 = vmul.f32 %v913, %v1004
        %v1029 = vmul.f32 %v915, %v1005
        %v1030 = vmul.f32 %v917, %v1006
        %v1031 = vmul.f32 %v919, %v1007
        %vm1032 = vcmask 1047616
        %1033 = vrot.lane.b32.xlu0 %v737, 8
        %v1034 = vpop.permute.xlu0 %1033
        %v1035 = vsel %vm1032, %v1034, %v737
        %1036 = vrot.lane.b32.xlu0 %v739, 8
        %v1037 = vpop.permute.xlu0 %1036
        %v1038 = vsel %vm1032, %v1037, %v739
        %1039 = vrot.lane.b32.xlu0 %v741, 8
        %v1040 = vpop.permute.xlu0 %1039
        %v1041 = vsel %vm1032, %v1040, %v741
        %1042 = vrot.lane.b32.xlu0 %v743, 8
        %v1043 = vpop.permute.xlu0 %1042
        %v1044 = vsel %vm1032, %v1043, %v743
        %1045 = vrot.lane.b32.xlu0 %v745, 8
        %v1046 = vpop.permute.xlu0 %1045
        %v1047 = vsel %vm1032, %v1046, %v745
        %1048 = vrot.lane.b32.xlu0 %v747, 8
        %v1049 = vpop.permute.xlu0 %1048
        %v1050 = vsel %vm1032, %v1049, %v747
        %1051 = vrot.lane.b32.xlu0 %v749, 8
        %v1052 = vpop.permute.xlu0 %1051
        %v1053 = vsel %vm1032, %v1052, %v749
        %1054 = vrot.lane.b32.xlu0 %v751, 8
        %v1055 = vpop.permute.xlu0 %1054
        %v1056 = vsel %vm1032, %v1055, %v751
        %1057 = vrot.lane.b32.xlu0 %v905, 8
        %v1058 = vpop.permute.xlu0 %1057
        %v1059 = vsel %vm1032, %v1058, %v905
        %1060 = vrot.lane.b32.xlu0 %v907, 8
        %v1061 = vpop.permute.xlu0 %1060
        %v1062 = vsel %vm1032, %v1061, %v907
        %1063 = vrot.lane.b32.xlu0 %v909, 8
        %v1064 = vpop.permute.xlu0 %1063
        %v1065 = vsel %vm1032, %v1064, %v909
        %1066 = vrot.lane.b32.xlu0 %v911, 8
        %v1067 = vpop.permute.xlu0 %1066
        %v1068 = vsel %vm1032, %v1067, %v911
        %1069 = vrot.lane.b32.xlu0 %v913, 8
        %v1070 = vpop.permute.xlu0 %1069
        %v1071 = vsel %vm1032, %v1070, %v913
        %1072 = vrot.lane.b32.xlu0 %v915, 8
        %v1073 = vpop.permute.xlu0 %1072
        %v1074 = vsel %vm1032, %v1073, %v915
        %1075 = vrot.lane.b32.xlu0 %v917, 8
        %v1076 = vpop.permute.xlu0 %1075
        %v1077 = vsel %vm1032, %v1076, %v917
        %1078 = vrot.lane.b32.xlu0 %v919, 8
        %v1079 = vpop.permute.xlu0 %1078
        %v1080 = vsel %vm1032, %v1079, %v919
        %1081 = vrot.lane.b32.xlu0 %v1035, 8
        %v1082 = vpop.permute.xlu0 %1081
        %1083 = vrot.lane.b32.xlu0 %v1038, 8
        %v1084 = vpop.permute.xlu0 %1083
        %1085 = vrot.lane.b32.xlu0 %v1041, 8
        %v1086 = vpop.permute.xlu0 %1085
        %1087 = vrot.lane.b32.xlu0 %v1044, 8
        %v1088 = vpop.permute.xlu0 %1087
        %1089 = vrot.lane.b32.xlu0 %v1047, 8
        %v1090 = vpop.permute.xlu0 %1089
        %1091 = vrot.lane.b32.xlu0 %v1050, 8
        %v1092 = vpop.permute.xlu0 %1091
        %1093 = vrot.lane.b32.xlu0 %v1053, 8
        %v1094 = vpop.permute.xlu0 %1093
        %1095 = vrot.lane.b32.xlu0 %v1056, 8
        %v1096 = vpop.permute.xlu0 %1095
        %1097 = vrot.lane.b32.xlu0 %v1059, 8
        %v1098 = vpop.permute.xlu0 %1097
        %1099 = vrot.lane.b32.xlu0 %v1062, 8
        %v1100 = vpop.permute.xlu0 %1099
        %1101 = vrot.lane.b32.xlu0 %v1065, 8
        %v1102 = vpop.permute.xlu0 %1101
        %1103 = vrot.lane.b32.xlu0 %v1068, 8
        %v1104 = vpop.permute.xlu0 %1103
        %1105 = vrot.lane.b32.xlu0 %v1071, 8
        %v1106 = vpop.permute.xlu0 %1105
        %1107 = vrot.lane.b32.xlu0 %v1074, 8
        %v1108 = vpop.permute.xlu0 %1107
        %1109 = vrot.lane.b32.xlu0 %v1077, 8
        %v1110 = vpop.permute.xlu0 %1109
        %1111 = vrot.lane.b32.xlu0 %v1080, 8
        %v1112 = vpop.permute.xlu0 %1111
        %v1113 = vsel %vm1032, %v1082, %v737
        %v1114 = vsel %vm1032, %v1084, %v739
        %v1115 = vsel %vm1032, %v1086, %v741
        %v1116 = vsel %vm1032, %v1088, %v743
        %v1117 = vsel %vm1032, %v1090, %v745
        %v1118 = vsel %vm1032, %v1092, %v747
        %v1119 = vsel %vm1032, %v1094, %v749
        %v1120 = vsel %vm1032, %v1096, %v751
        %v1121 = vsel %vm1032, %v1098, %v905
        %v1122 = vsel %vm1032, %v1100, %v907
        %v1123 = vsel %vm1032, %v1102, %v909
        %v1124 = vsel %vm1032, %v1104, %v911
        %v1125 = vsel %vm1032, %v1106, %v913
        %v1126 = vsel %vm1032, %v1108, %v915
        %v1127 = vsel %vm1032, %v1110, %v917
        %v1128 = vsel %vm1032, %v1112, %v919
        %v1137 = vperm.slane %v984, 0
        %v1138 = vperm.slane %v985, 0
        %v1139 = vperm.slane %v986, 0
        %v1140 = vperm.slane %v987, 0
        %v1141 = vperm.slane %v988, 0
        %v1142 = vperm.slane %v989, 0
        %v1143 = vperm.slane %v990, 0
        %v1144 = vperm.slane %v991, 0
        %1145 = vrot.lane.b32.xlu0 %v1137, 4
        %v1146 = vpop.permute.xlu0 %1145
        %1147 = vrot.lane.b32.xlu0 %v1138, 4
        %v1148 = vpop.permute.xlu0 %1147
        %1149 = vrot.lane.b32.xlu0 %v1139, 4
        %v1150 = vpop.permute.xlu0 %1149
        %1151 = vrot.lane.b32.xlu0 %v1140, 4
        %v1152 = vpop.permute.xlu0 %1151
        %1153 = vrot.lane.b32.xlu0 %v1141, 4
        %v1154 = vpop.permute.xlu0 %1153
        %1155 = vrot.lane.b32.xlu0 %v1142, 4
        %v1156 = vpop.permute.xlu0 %1155
        %1157 = vrot.lane.b32.xlu0 %v1143, 4
        %v1158 = vpop.permute.xlu0 %1157
        %1159 = vrot.lane.b32.xlu0 %v1144, 4
        %v1160 = vpop.permute.xlu0 %1159
        %v1169 = vmul.f32 %v1113, %v1146
        %v1170 = vmul.f32 %v1114, %v1148
        %v1171 = vmul.f32 %v1115, %v1150
        %v1172 = vmul.f32 %v1116, %v1152
        %v1173 = vmul.f32 %v1117, %v1154
        %v1174 = vmul.f32 %v1118, %v1156
        %v1175 = vmul.f32 %v1119, %v1158
        %v1176 = vmul.f32 %v1120, %v1160
        %v1177 = vmul.f32 %v1121, %v1146
        %v1178 = vmul.f32 %v1122, %v1148
        %v1179 = vmul.f32 %v1123, %v1150
        %v1180 = vmul.f32 %v1124, %v1152
        %v1181 = vmul.f32 %v1125, %v1154
        %v1182 = vmul.f32 %v1126, %v1156
        %v1183 = vmul.f32 %v1127, %v1158
        %v1184 = vmul.f32 %v1128, %v1160
        %1201 = vrot.lane.b32.xlu0 %v1169, 124
        %v1202 = vpop.permute.xlu0 %1201
        %1203 = vrot.lane.b32.xlu0 %v1170, 124
        %v1204 = vpop.permute.xlu0 %1203
        %1205 = vrot.lane.b32.xlu0 %v1171, 124
        %v1206 = vpop.permute.xlu0 %1205
        %1207 = vrot.lane.b32.xlu0 %v1172, 124
        %v1208 = vpop.permute.xlu0 %1207
        %1209 = vrot.lane.b32.xlu0 %v1173, 124
        %v1210 = vpop.permute.xlu0 %1209
        %1211 = vrot.lane.b32.xlu0 %v1174, 124
        %v1212 = vpop.permute.xlu0 %1211
        %1213 = vrot.lane.b32.xlu0 %v1175, 124
        %v1214 = vpop.permute.xlu0 %1213
        %1215 = vrot.lane.b32.xlu0 %v1176, 124
        %v1216 = vpop.permute.xlu0 %1215
        %1217 = vrot.lane.b32.xlu0 %v1177, 124
        %v1218 = vpop.permute.xlu0 %1217
        %1219 = vrot.lane.b32.xlu0 %v1178, 124
        %v1220 = vpop.permute.xlu0 %1219
        %1221 = vrot.lane.b32.xlu0 %v1179, 124
        %v1222 = vpop.permute.xlu0 %1221
        %1223 = vrot.lane.b32.xlu0 %v1180, 124
        %v1224 = vpop.permute.xlu0 %1223
        %1225 = vrot.lane.b32.xlu0 %v1181, 124
        %v1226 = vpop.permute.xlu0 %1225
        %1227 = vrot.lane.b32.xlu0 %v1182, 124
        %v1228 = vpop.permute.xlu0 %1227
        %1229 = vrot.lane.b32.xlu0 %v1183, 124
        %v1230 = vpop.permute.xlu0 %1229
        %1231 = vrot.lane.b32.xlu0 %v1184, 124
        %v1232 = vpop.permute.xlu0 %1231
        %v1249 = vadd.f32 %v1016, %v1202
        %v1250 = vadd.f32 %v1017, %v1204
        %v1251 = vadd.f32 %v1018, %v1206
        %v1252 = vadd.f32 %v1019, %v1208
        %v1253 = vadd.f32 %v1020, %v1210
        %v1254 = vadd.f32 %v1021, %v1212
        %v1255 = vadd.f32 %v1022, %v1214
        %v1256 = vadd.f32 %v1023, %v1216
        %v1257 = vadd.f32 %v1024, %v1218
        %v1258 = vadd.f32 %v1025, %v1220
        %v1259 = vadd.f32 %v1026, %v1222
        %v1260 = vadd.f32 %v1027, %v1224
        %v1261 = vadd.f32 %v1028, %v1226
        %v1262 = vadd.f32 %v1029, %v1228
        %v1263 = vadd.f32 %v1030, %v1230
        %v1264 = vadd.f32 %v1031, %v1232
        %v1281 = vrot.slane %v737, 4
        %v1282 = vrot.slane %v739, 4
        %v1283 = vrot.slane %v741, 4
        %v1284 = vrot.slane %v743, 4
        %v1285 = vrot.slane %v745, 4
        %v1286 = vrot.slane %v747, 4
        %v1287 = vrot.slane %v749, 4
        %v1288 = vrot.slane %v751, 4
        %v1289 = vrot.slane %v905, 4
        %v1290 = vrot.slane %v907, 4
        %v1291 = vrot.slane %v909, 4
        %v1292 = vrot.slane %v911, 4
        %v1293 = vrot.slane %v913, 4
        %v1294 = vrot.slane %v915, 4
        %v1295 = vrot.slane %v917, 4
        %v1296 = vrot.slane %v919, 4
        %1313 = vrot.lane.b32.xlu0 %v1281, 8
        %v1314 = vpop.permute.xlu0 %1313
        %v1315 = vsel %vm1032, %v1314, %v1281
        %1316 = vrot.lane.b32.xlu0 %v1282, 8
        %v1317 = vpop.permute.xlu0 %1316
        %v1318 = vsel %vm1032, %v1317, %v1282
        %1319 = vrot.lane.b32.xlu0 %v1283, 8
        %v1320 = vpop.permute.xlu0 %1319
        %v1321 = vsel %vm1032, %v1320, %v1283
        %1322 = vrot.lane.b32.xlu0 %v1284, 8
        %v1323 = vpop.permute.xlu0 %1322
        %v1324 = vsel %vm1032, %v1323, %v1284
        %1325 = vrot.lane.b32.xlu0 %v1285, 8
        %v1326 = vpop.permute.xlu0 %1325
        %v1327 = vsel %vm1032, %v1326, %v1285
        %1328 = vrot.lane.b32.xlu0 %v1286, 8
        %v1329 = vpop.permute.xlu0 %1328
        %v1330 = vsel %vm1032, %v1329, %v1286
        %1331 = vrot.lane.b32.xlu0 %v1287, 8
        %v1332 = vpop.permute.xlu0 %1331
        %v1333 = vsel %vm1032, %v1332, %v1287
        %1334 = vrot.lane.b32.xlu0 %v1288, 8
        %v1335 = vpop.permute.xlu0 %1334
        %v1336 = vsel %vm1032, %v1335, %v1288
        %1337 = vrot.lane.b32.xlu0 %v1289, 8
        %v1338 = vpop.permute.xlu0 %1337
        %v1339 = vsel %vm1032, %v1338, %v1289
        %1340 = vrot.lane.b32.xlu0 %v1290, 8
        %v1341 = vpop.permute.xlu0 %1340
        %v1342 = vsel %vm1032, %v1341, %v1290
        %1343 = vrot.lane.b32.xlu0 %v1291, 8
        %v1344 = vpop.permute.xlu0 %1343
        %v1345 = vsel %vm1032, %v1344, %v1291
        %1346 = vrot.lane.b32.xlu0 %v1292, 8
        %v1347 = vpop.permute.xlu0 %1346
        %v1348 = vsel %vm1032, %v1347, %v1292
        %1349 = vrot.lane.b32.xlu0 %v1293, 8
        %v1350 = vpop.permute.xlu0 %1349
        %v1351 = vsel %vm1032, %v1350, %v1293
        %1352 = vrot.lane.b32.xlu0 %v1294, 8
        %v1353 = vpop.permute.xlu0 %1352
        %v1354 = vsel %vm1032, %v1353, %v1294
        %1355 = vrot.lane.b32.xlu0 %v1295, 8
        %v1356 = vpop.permute.xlu0 %1355
        %v1357 = vsel %vm1032, %v1356, %v1295
        %1358 = vrot.lane.b32.xlu0 %v1296, 8
        %v1359 = vpop.permute.xlu0 %1358
        %v1360 = vsel %vm1032, %v1359, %v1296
        %1361 = vrot.lane.b32.xlu0 %v1315, 8
        %v1362 = vpop.permute.xlu0 %1361
        %1363 = vrot.lane.b32.xlu0 %v1318, 8
        %v1364 = vpop.permute.xlu0 %1363
        %1365 = vrot.lane.b32.xlu0 %v1321, 8
        %v1366 = vpop.permute.xlu0 %1365
        %1367 = vrot.lane.b32.xlu0 %v1324, 8
        %v1368 = vpop.permute.xlu0 %1367
        %1369 = vrot.lane.b32.xlu0 %v1327, 8
        %v1370 = vpop.permute.xlu0 %1369
        %1371 = vrot.lane.b32.xlu0 %v1330, 8
        %v1372 = vpop.permute.xlu0 %1371
        %1373 = vrot.lane.b32.xlu0 %v1333, 8
        %v1374 = vpop.permute.xlu0 %1373
        %1375 = vrot.lane.b32.xlu0 %v1336, 8
        %v1376 = vpop.permute.xlu0 %1375
        %1377 = vrot.lane.b32.xlu0 %v1339, 8
        %v1378 = vpop.permute.xlu0 %1377
        %1379 = vrot.lane.b32.xlu0 %v1342, 8
        %v1380 = vpop.permute.xlu0 %1379
        %1381 = vrot.lane.b32.xlu0 %v1345, 8
        %v1382 = vpop.permute.xlu0 %1381
        %1383 = vrot.lane.b32.xlu0 %v1348, 8
        %v1384 = vpop.permute.xlu0 %1383
        %1385 = vrot.lane.b32.xlu0 %v1351, 8
        %v1386 = vpop.permute.xlu0 %1385
        %1387 = vrot.lane.b32.xlu0 %v1354, 8
        %v1388 = vpop.permute.xlu0 %1387
        %1389 = vrot.lane.b32.xlu0 %v1357, 8
        %v1390 = vpop.permute.xlu0 %1389
        %1391 = vrot.lane.b32.xlu0 %v1360, 8
        %v1392 = vpop.permute.xlu0 %1391
        %v1393 = vsel %vm1032, %v1362, %v1281
        %v1394 = vsel %vm1032, %v1364, %v1282
        %v1395 = vsel %vm1032, %v1366, %v1283
        %v1396 = vsel %vm1032, %v1368, %v1284
        %v1397 = vsel %vm1032, %v1370, %v1285
        %v1398 = vsel %vm1032, %v1372, %v1286
        %v1399 = vsel %vm1032, %v1374, %v1287
        %v1400 = vsel %vm1032, %v1376, %v1288
        %v1401 = vsel %vm1032, %v1378, %v1289
        %v1402 = vsel %vm1032, %v1380, %v1290
        %v1403 = vsel %vm1032, %v1382, %v1291
        %v1404 = vsel %vm1032, %v1384, %v1292
        %v1405 = vsel %vm1032, %v1386, %v1293
        %v1406 = vsel %vm1032, %v1388, %v1294
        %v1407 = vsel %vm1032, %v1390, %v1295
        %v1408 = vsel %vm1032, %v1392, %v1296
        %v1409 = vmul.f32 %v1393, %v1146
        %v1410 = vmul.f32 %v1394, %v1148
        %v1411 = vmul.f32 %v1395, %v1150
        %v1412 = vmul.f32 %v1396, %v1152
        %v1413 = vmul.f32 %v1397, %v1154
        %v1414 = vmul.f32 %v1398, %v1156
        %v1415 = vmul.f32 %v1399, %v1158
        %v1416 = vmul.f32 %v1400, %v1160
        %v1417 = vmul.f32 %v1401, %v1146
        %v1418 = vmul.f32 %v1402, %v1148
        %v1419 = vmul.f32 %v1403, %v1150
        %v1420 = vmul.f32 %v1404, %v1152
        %v1421 = vmul.f32 %v1405, %v1154
        %v1422 = vmul.f32 %v1406, %v1156
        %v1423 = vmul.f32 %v1407, %v1158
        %v1424 = vmul.f32 %v1408, %v1160
        %v1441 = vrot.slane %v1409, 4
        %v1442 = vrot.slane %v1410, 4
        %v1443 = vrot.slane %v1411, 4
        %v1444 = vrot.slane %v1412, 4
        %v1445 = vrot.slane %v1413, 4
        %v1446 = vrot.slane %v1414, 4
        %v1447 = vrot.slane %v1415, 4
        %v1448 = vrot.slane %v1416, 4
        %v1449 = vrot.slane %v1417, 4
        %v1450 = vrot.slane %v1418, 4
        %v1451 = vrot.slane %v1419, 4
        %v1452 = vrot.slane %v1420, 4
        %v1453 = vrot.slane %v1421, 4
        %v1454 = vrot.slane %v1422, 4
        %v1455 = vrot.slane %v1423, 4
        %v1456 = vrot.slane %v1424, 4
        %1457 = vrot.lane.b32.xlu0 %v1441, 124
        %v1458 = vpop.permute.xlu0 %1457
        %1459 = vrot.lane.b32.xlu0 %v1442, 124
        %v1460 = vpop.permute.xlu0 %1459
        %1461 = vrot.lane.b32.xlu0 %v1443, 124
        %v1462 = vpop.permute.xlu0 %1461
        %1463 = vrot.lane.b32.xlu0 %v1444, 124
        %v1464 = vpop.permute.xlu0 %1463
        %1465 = vrot.lane.b32.xlu0 %v1445, 124
        %v1466 = vpop.permute.xlu0 %1465
        %1467 = vrot.lane.b32.xlu0 %v1446, 124
        %v1468 = vpop.permute.xlu0 %1467
        %1469 = vrot.lane.b32.xlu0 %v1447, 124
        %v1470 = vpop.permute.xlu0 %1469
        %1471 = vrot.lane.b32.xlu0 %v1448, 124
        %v1472 = vpop.permute.xlu0 %1471
        %1473 = vrot.lane.b32.xlu0 %v1449, 124
        %v1474 = vpop.permute.xlu0 %1473
        %1475 = vrot.lane.b32.xlu0 %v1450, 124
        %v1476 = vpop.permute.xlu0 %1475
        %1477 = vrot.lane.b32.xlu0 %v1451, 124
        %v1478 = vpop.permute.xlu0 %1477
        %1479 = vrot.lane.b32.xlu0 %v1452, 124
        %v1480 = vpop.permute.xlu0 %1479
        %1481 = vrot.lane.b32.xlu0 %v1453, 124
        %v1482 = vpop.permute.xlu0 %1481
        %1483 = vrot.lane.b32.xlu0 %v1454, 124
        %v1484 = vpop.permute.xlu0 %1483
        %1485 = vrot.lane.b32.xlu0 %v1455, 124
        %v1486 = vpop.permute.xlu0 %1485
        %1487 = vrot.lane.b32.xlu0 %v1456, 124
        %v1488 = vpop.permute.xlu0 %1487
        %v1505 = vadd.f32 %v1016, %v1458
        %v1506 = vadd.f32 %v1017, %v1460
        %v1507 = vadd.f32 %v1018, %v1462
        %v1508 = vadd.f32 %v1019, %v1464
        %v1509 = vadd.f32 %v1020, %v1466
        %v1510 = vadd.f32 %v1021, %v1468
        %v1511 = vadd.f32 %v1022, %v1470
        %v1512 = vadd.f32 %v1023, %v1472
        %v1513 = vadd.f32 %v1024, %v1474
        %v1514 = vadd.f32 %v1025, %v1476
        %v1515 = vadd.f32 %v1026, %v1478
        %v1516 = vadd.f32 %v1027, %v1480
        %v1517 = vadd.f32 %v1028, %v1482
        %v1518 = vadd.f32 %v1029, %v1484
        %v1519 = vadd.f32 %v1030, %v1486
        %v1520 = vadd.f32 %v1031, %v1488
        %v1521 = vpack.c.bf16 %v1249, %v1249
        %v1522 = vpack.c.bf16 %v1250, %v1250
        %v1523 = vpack.c.bf16 %v1251, %v1251
        %v1524 = vpack.c.bf16 %v1252, %v1252
        %v1525 = vpack.c.bf16 %v1253, %v1253
        %v1526 = vpack.c.bf16 %v1254, %v1254
        %v1527 = vpack.c.bf16 %v1255, %v1255
        %v1528 = vpack.c.bf16 %v1256, %v1256
        %v1529 = vpack.c.bf16 %v1257, %v1257
        %v1530 = vpack.c.bf16 %v1258, %v1258
        %v1531 = vpack.c.bf16 %v1259, %v1259
        %v1532 = vpack.c.bf16 %v1260, %v1260
        %v1533 = vpack.c.bf16 %v1261, %v1261
        %v1534 = vpack.c.bf16 %v1262, %v1262
        %v1535 = vpack.c.bf16 %v1263, %v1263
        %v1536 = vpack.c.bf16 %v1264, %v1264
        %v1537 = vpack.c.bf16 %v1505, %v1505
        %v1538 = vpack.c.bf16 %v1506, %v1506
        %v1539 = vpack.c.bf16 %v1507, %v1507
        %v1540 = vpack.c.bf16 %v1508, %v1508
        %v1541 = vpack.c.bf16 %v1509, %v1509
        %v1542 = vpack.c.bf16 %v1510, %v1510
        %v1543 = vpack.c.bf16 %v1511, %v1511
        %v1544 = vpack.c.bf16 %v1512, %v1512
        %v1545 = vpack.c.bf16 %v1513, %v1513
        %v1546 = vpack.c.bf16 %v1514, %v1514
        %v1547 = vpack.c.bf16 %v1515, %v1515
        %v1548 = vpack.c.bf16 %v1516, %v1516
        %v1549 = vpack.c.bf16 %v1517, %v1517
        %v1550 = vpack.c.bf16 %v1518, %v1518
        %v1551 = vpack.c.bf16 %v1519, %v1519
        %v1552 = vpack.c.bf16 %v1520, %v1520
        %v1553 = vpack.c.bf16 %v783, %v783
        %v1554 = vpack.c.bf16 %v801, %v801
        %v1555 = vpack.c.bf16 %v787, %v787
        %v1556 = vpack.c.bf16 %v803, %v803
        %v1557 = vpack.c.bf16 %v795, %v795
        %v1558 = vpack.c.bf16 %v805, %v805
        %v1559 = vpack.c.bf16 %v799, %v799
        %v1560 = vpack.c.bf16 %v807, %v807
        %v1561 = vpack.c.bf16 %v951, %v951
        %v1562 = vpack.c.bf16 %v969, %v969
        %v1563 = vpack.c.bf16 %v955, %v955
        %v1564 = vpack.c.bf16 %v971, %v971
        %v1565 = vpack.c.bf16 %v963, %v963
        %v1566 = vpack.c.bf16 %v973, %v973
        %v1567 = vpack.c.bf16 %v967, %v967
        %v1568 = vpack.c.bf16 %v975, %v975
        %v1569 = vlaneseq
        %v1570 = vshrl.u32 %v1569, 7
        %v1571 = vlaneseq
        %v1572 = vand.u32 %v1571, 127
        %vm1573 = vcmp.ge.s32.totalorder %v1570, %v1572
        %v1574 = vsel %vm1573, 0.0, -1e+30
        %v1583 = vunpack.c.l.b16 %v1521
        %v1584 = vunpack.c.l.b16 %v1522
        %v1585 = vunpack.c.l.b16 %v1523
        %v1586 = vunpack.c.l.b16 %v1524
        %v1587 = vunpack.c.l.b16 %v1525
        %v1588 = vunpack.c.l.b16 %v1526
        %v1589 = vunpack.c.l.b16 %v1527
        %v1590 = vunpack.c.l.b16 %v1528
        %v1591 = vpack.c.b16 %v1583, %v1583
        %v1592 = vpack.c.b16 %v1584, %v1584
        %v1593 = vpack.c.b16 %v1585, %v1585
        %v1594 = vpack.c.b16 %v1586, %v1586
        %v1595 = vpack.c.b16 %v1587, %v1587
        %v1596 = vpack.c.b16 %v1588, %v1588
        %v1597 = vpack.c.b16 %v1589, %v1589
        %v1598 = vpack.c.b16 %v1590, %v1590
        %v1599 = vunpack.c.l.b16 %v1591
        %v1600 = vunpack.c.l.b16 %v1592
        %v1601 = vunpack.c.l.b16 %v1593
        %v1602 = vunpack.c.l.b16 %v1594
        %v1603 = vunpack.c.l.b16 %v1595
        %v1604 = vunpack.c.l.b16 %v1596
        %v1605 = vunpack.c.l.b16 %v1597
        %v1606 = vunpack.c.l.b16 %v1598
        %v1607 = vrot.slane %v1600, 7
        %vm1608 = vcmask 1041409
        %v1609 = vsel %vm1608, %v1607, %v1599
        %v1610 = vrot.slane %v1601, 6
        %vm1611 = vcmask 1042434
        %v1612 = vsel %vm1611, %v1610, %v1609
        %v1613 = vrot.slane %v1602, 5
        %vm1614 = vcmask 1043459
        %v1615 = vsel %vm1614, %v1613, %v1612
        %v1616 = vrot.slane %v1603, 4
        %vm1617 = vcmask 1044484
        %v1618 = vsel %vm1617, %v1616, %v1615
        %v1619 = vrot.slane %v1604, 3
        %vm1620 = vcmask 1045509
        %v1621 = vsel %vm1620, %v1619, %v1618
        %v1622 = vrot.slane %v1605, 2
        %vm1623 = vcmask 1046534
        %v1624 = vsel %vm1623, %v1622, %v1621
        %v1625 = vrot.slane %v1606, 1
        %vm1626 = vcmask 1047559
        %v1627 = vsel %vm1626, %v1625, %v1624
        %v1628 = vpack.c.b16 %v1627, %v1627
        %v1637 = vunpack.c.l.b16 %v1537
        %v1638 = vunpack.c.l.b16 %v1538
        %v1639 = vunpack.c.l.b16 %v1539
        %v1640 = vunpack.c.l.b16 %v1540
        %v1641 = vunpack.c.l.b16 %v1541
        %v1642 = vunpack.c.l.b16 %v1542
        %v1643 = vunpack.c.l.b16 %v1543
        %v1644 = vunpack.c.l.b16 %v1544
        %v1645 = vpack.c.b16 %v1637, %v1637
        %v1646 = vpack.c.b16 %v1638, %v1638
        %v1647 = vpack.c.b16 %v1639, %v1639
        %v1648 = vpack.c.b16 %v1640, %v1640
        %v1649 = vpack.c.b16 %v1641, %v1641
        %v1650 = vpack.c.b16 %v1642, %v1642
        %v1651 = vpack.c.b16 %v1643, %v1643
        %v1652 = vpack.c.b16 %v1644, %v1644
        %v1653 = vunpack.c.l.b16 %v1645
        %v1654 = vunpack.c.l.b16 %v1646
        %v1655 = vunpack.c.l.b16 %v1647
        %v1656 = vunpack.c.l.b16 %v1648
        %v1657 = vunpack.c.l.b16 %v1649
        %v1658 = vunpack.c.l.b16 %v1650
        %v1659 = vunpack.c.l.b16 %v1651
        %v1660 = vunpack.c.l.b16 %v1652
        %v1661 = vrot.slane %v1653, 4
        %v1662 = vrot.slane %v1654, 3
        %v1663 = vsel %vm1608, %v1662, %v1661
        %v1664 = vrot.slane %v1655, 2
        %v1665 = vsel %vm1611, %v1664, %v1663
        %v1666 = vrot.slane %v1656, 1
        %v1667 = vsel %vm1614, %v1666, %v1665
        %v1668 = vsel %vm1617, %v1657, %v1667
        %v1669 = vrot.slane %v1658, 7
        %v1670 = vsel %vm1620, %v1669, %v1668
        %v1671 = vrot.slane %v1659, 6
        %v1672 = vsel %vm1623, %v1671, %v1670
        %v1673 = vrot.slane %v1660, 5
        %v1674 = vsel %vm1626, %v1673, %v1672
        %v1675 = vpack.c.b16 %v1674, %v1674
        %vm1676 = vcmask 64512
        %v1678 = vsel %vm1676, %v1628, 0
        %v1681 = vsel %vm1676, %v1675, 0
        %1683 = vmatpush.bf16.xpose.msra.mxu0 0
        %1684 = vmatpush.bf16.xpose.msra.mxu0 0
        %1685 = vmatpush.bf16.xpose.msra.mxu0 0
        %1686 = vmatpush.bf16.xpose.msra.mxu0 0
        %1687 = vmatpush.bf16.xpose.msra.mxu0 0
        %1688 = vmatpush.bf16.xpose.msra.mxu0 0
        %1689 = vmatpush.bf16.xpose.msra.mxu0 0
        %1690 = vmatpush.bf16.xpose.msra.mxu0 %v1681
        %1691 = vmatmul.bf16.gmra.mxu0 %v1678
        %v1692 = vpop.f32.mrf.mxu0
        %v1693 = vadd.f32 %v1574, %v1692
        %v1694 = vpop.f32.mrf.mxu0
        %1695 = vdwg.mxu0
        %v1704 = vunpack.c.l.b16 %v1529
        %v1705 = vunpack.c.l.b16 %v1530
        %v1706 = vunpack.c.l.b16 %v1531
        %v1707 = vunpack.c.l.b16 %v1532
        %v1708 = vunpack.c.l.b16 %v1533
        %v1709 = vunpack.c.l.b16 %v1534
        %v1710 = vunpack.c.l.b16 %v1535
        %v1711 = vunpack.c.l.b16 %v1536
        %v1712 = vpack.c.b16 %v1704, %v1704
        %v1713 = vpack.c.b16 %v1705, %v1705
        %v1714 = vpack.c.b16 %v1706, %v1706
        %v1715 = vpack.c.b16 %v1707, %v1707
        %v1716 = vpack.c.b16 %v1708, %v1708
        %v1717 = vpack.c.b16 %v1709, %v1709
        %v1718 = vpack.c.b16 %v1710, %v1710
        %v1719 = vpack.c.b16 %v1711, %v1711
        %v1720 = vunpack.c.l.b16 %v1712
        %v1721 = vunpack.c.l.b16 %v1713
        %v1722 = vunpack.c.l.b16 %v1714
        %v1723 = vunpack.c.l.b16 %v1715
        %v1724 = vunpack.c.l.b16 %v1716
        %v1725 = vunpack.c.l.b16 %v1717
        %v1726 = vunpack.c.l.b16 %v1718
        %v1727 = vunpack.c.l.b16 %v1719
        %v1728 = vrot.slane %v1721, 7
        %v1729 = vsel %vm1608, %v1728, %v1720
        %v1730 = vrot.slane %v1722, 6
        %v1731 = vsel %vm1611, %v1730, %v1729
        %v1732 = vrot.slane %v1723, 5
        %v1733 = vsel %vm1614, %v1732, %v1731
        %v1734 = vrot.slane %v1724, 4
        %v1735 = vsel %vm1617, %v1734, %v1733
        %v1736 = vrot.slane %v1725, 3
        %v1737 = vsel %vm1620, %v1736, %v1735
        %v1738 = vrot.slane %v1726, 2
        %v1739 = vsel %vm1623, %v1738, %v1737
        %v1740 = vrot.slane %v1727, 1
        %v1741 = vsel %vm1626, %v1740, %v1739
        %v1742 = vpack.c.b16 %v1741, %v1741
        %v1751 = vunpack.c.l.b16 %v1545
        %v1752 = vunpack.c.l.b16 %v1546
        %v1753 = vunpack.c.l.b16 %v1547
        %v1754 = vunpack.c.l.b16 %v1548
        %v1755 = vunpack.c.l.b16 %v1549
        %v1756 = vunpack.c.l.b16 %v1550
        %v1757 = vunpack.c.l.b16 %v1551
        %v1758 = vunpack.c.l.b16 %v1552
        %v1759 = vpack.c.b16 %v1751, %v1751
        %v1760 = vpack.c.b16 %v1752, %v1752
        %v1761 = vpack.c.b16 %v1753, %v1753
        %v1762 = vpack.c.b16 %v1754, %v1754
        %v1763 = vpack.c.b16 %v1755, %v1755
        %v1764 = vpack.c.b16 %v1756, %v1756
        %v1765 = vpack.c.b16 %v1757, %v1757
        %v1766 = vpack.c.b16 %v1758, %v1758
        %v1767 = vunpack.c.l.b16 %v1759
        %v1768 = vunpack.c.l.b16 %v1760
        %v1769 = vunpack.c.l.b16 %v1761
        %v1770 = vunpack.c.l.b16 %v1762
        %v1771 = vunpack.c.l.b16 %v1763
        %v1772 = vunpack.c.l.b16 %v1764
        %v1773 = vunpack.c.l.b16 %v1765
        %v1774 = vunpack.c.l.b16 %v1766
        %v1775 = vrot.slane %v1767, 4
        %v1776 = vrot.slane %v1768, 3
        %v1777 = vsel %vm1608, %v1776, %v1775
        %v1778 = vrot.slane %v1769, 2
        %v1779 = vsel %vm1611, %v1778, %v1777
        %v1780 = vrot.slane %v1770, 1
        %v1781 = vsel %vm1614, %v1780, %v1779
        %v1782 = vsel %vm1617, %v1771, %v1781
        %v1783 = vrot.slane %v1772, 7
        %v1784 = vsel %vm1620, %v1783, %v1782
        %v1785 = vrot.slane %v1773, 6
        %v1786 = vsel %vm1623, %v1785, %v1784
        %v1787 = vrot.slane %v1774, 5
        %v1788 = vsel %vm1626, %v1787, %v1786
        %v1789 = vpack.c.b16 %v1788, %v1788
        %v1791 = vsel %vm1676, %v1742, 0
        %v1794 = vsel %vm1676, %v1789, 0
        %1796 = vmatpush.bf16.xpose.msra.mxu0 0
        %1797 = vmatpush.bf16.xpose.msra.mxu0 0
        %1798 = vmatpush.bf16.xpose.msra.mxu0 0
        %1799 = vmatpush.bf16.xpose.msra.mxu0 0
        %1800 = vmatpush.bf16.xpose.msra.mxu0 0
        %1801 = vmatpush.bf16.xpose.msra.mxu0 0
        %1802 = vmatpush.bf16.xpose.msra.mxu0 0
        %1803 = vmatpush.bf16.xpose.msra.mxu0 %v1794
        %1804 = vmatmul.bf16.gmra.mxu0 %v1791
        %v1805 = vpop.f32.mrf.mxu0
        %v1806 = vadd.f32 %v1574, %v1805
        %v1807 = vpop.f32.mrf.mxu0
        %1808 = vdwg.mxu0
        %v1809 = vsel %vm1676, %v1693, -inf
        %1810 = vmax.xlane.f32.xlu0 %v1809
        %v1811 = vpop.xlane.xlu0 %1810
        %v1812 = vsel %vm1676, %v1806, -inf
        %1813 = vmax.xlane.f32.xlu0 %v1812
        %v1814 = vpop.xlane.xlu0 %1813
        %v1815 = vsub.f32 %v1693, %v1811
        %v1816 = vsub.f32 %v1806, %v1814
        %v1817 = vmul.f32 %v1815, 1.442695
        %v1818 = vpow.pop %v1817
        %v1819 = vmul.f32 %v1816, 1.442695
        %v1820 = vpow.pop %v1819
        %v1821 = vsel %vm1676, %v1818, 0.0
        %1822 = vadd.xlane.f32.xlu0 %v1821
        %v1823 = vpop.xlane.xlu0 %1822
        %v1824 = vsel %vm1676, %v1820, 0.0
        %1825 = vadd.xlane.f32.xlu0 %v1824
        %v1826 = vpop.xlane.xlu0 %1825
        %v1827 = vrcp.pop %v1823
        %v1828 = vrcp.pop %v1826
        %v1829 = vmul.f32 %v1818, %v1827
        %v1830 = vmul.f32 %v1820, %v1828
        %v1831 = vpack.c.bf16 %v1829, %v1829
        %v1832 = vpack.c.bf16 %v1830, %v1830
        %v1841 = vunpack.c.l.b16 %v1553
        %v1842 = vunpack.c.l.b16 %v1554
        %v1843 = vunpack.c.l.b16 %v1555
        %v1844 = vunpack.c.l.b16 %v1556
        %v1845 = vunpack.c.l.b16 %v1557
        %v1846 = vunpack.c.l.b16 %v1558
        %v1847 = vunpack.c.l.b16 %v1559
        %v1848 = vunpack.c.l.b16 %v1560
        %v1849 = vpack.c.b16 %v1841, %v1841
        %v1850 = vpack.c.b16 %v1842, %v1842
        %v1851 = vpack.c.b16 %v1843, %v1843
        %v1852 = vpack.c.b16 %v1844, %v1844
        %v1853 = vpack.c.b16 %v1845, %v1845
        %v1854 = vpack.c.b16 %v1846, %v1846
        %v1855 = vpack.c.b16 %v1847, %v1847
        %v1856 = vpack.c.b16 %v1848, %v1848
        %v1857 = vunpack.c.l.b16 %v1849
        %v1858 = vunpack.c.l.b16 %v1850
        %v1859 = vunpack.c.l.b16 %v1851
        %v1860 = vunpack.c.l.b16 %v1852
        %v1861 = vunpack.c.l.b16 %v1853
        %v1862 = vunpack.c.l.b16 %v1854
        %v1863 = vunpack.c.l.b16 %v1855
        %v1864 = vunpack.c.l.b16 %v1856
        %v1865 = vrot.slane %v1858, 7
        %v1866 = vsel %vm1608, %v1865, %v1857
        %v1867 = vrot.slane %v1859, 6
        %v1868 = vsel %vm1611, %v1867, %v1866
        %v1869 = vrot.slane %v1860, 5
        %v1870 = vsel %vm1614, %v1869, %v1868
        %v1871 = vrot.slane %v1861, 4
        %v1872 = vsel %vm1617, %v1871, %v1870
        %v1873 = vrot.slane %v1862, 3
        %v1874 = vsel %vm1620, %v1873, %v1872
        %v1875 = vrot.slane %v1863, 2
        %v1876 = vsel %vm1623, %v1875, %v1874
        %v1877 = vrot.slane %v1864, 1
        %v1878 = vsel %vm1626, %v1877, %v1876
        %v1879 = vpack.c.b16 %v1878, %v1878
        %v1881 = vsel %vm1676, %v1831, 0
        %vm1883 = vcmask 1043456
        %v1885 = vsel %vm1883, %v1879, 0
        %1887 = vmatpush.bf16.msra.mxu0 0
        %1888 = vmatpush.bf16.msra.mxu0 0
        %1889 = vmatpush.bf16.msra.mxu0 0
        %1890 = vmatpush.bf16.msra.mxu0 0
        %1891 = vmatpush.bf16.msra.mxu0 0
        %1892 = vmatpush.bf16.msra.mxu0 0
        %1893 = vmatpush.bf16.msra.mxu0 0
        %1894 = vmatpush.bf16.msra.mxu0 %v1885
        %1895 = vmatmul.bf16.gmra.mxu0 %v1881
        %v1896 = vpop.f32.mrf.mxu0
        %v1897 = vadd.f32 0.0, %v1896
        %v1898 = vpop.f32.mrf.mxu0
        %1899 = vdwg.mxu0
        %v1908 = vunpack.c.l.b16 %v1561
        %v1909 = vunpack.c.l.b16 %v1562
        %v1910 = vunpack.c.l.b16 %v1563
        %v1911 = vunpack.c.l.b16 %v1564
        %v1912 = vunpack.c.l.b16 %v1565
        %v1913 = vunpack.c.l.b16 %v1566
        %v1914 = vunpack.c.l.b16 %v1567
        %v1915 = vunpack.c.l.b16 %v1568
        %v1916 = vpack.c.b16 %v1908, %v1908
        %v1917 = vpack.c.b16 %v1909, %v1909
        %v1918 = vpack.c.b16 %v1910, %v1910
        %v1919 = vpack.c.b16 %v1911, %v1911
        %v1920 = vpack.c.b16 %v1912, %v1912
        %v1921 = vpack.c.b16 %v1913, %v1913
        %v1922 = vpack.c.b16 %v1914, %v1914
        %v1923 = vpack.c.b16 %v1915, %v1915
        %v1924 = vunpack.c.l.b16 %v1916
        %v1925 = vunpack.c.l.b16 %v1917
        %v1926 = vunpack.c.l.b16 %v1918
        %v1927 = vunpack.c.l.b16 %v1919
        %v1928 = vunpack.c.l.b16 %v1920
        %v1929 = vunpack.c.l.b16 %v1921
        %v1930 = vunpack.c.l.b16 %v1922
        %v1931 = vunpack.c.l.b16 %v1923
        %v1932 = vrot.slane %v1925, 7
        %v1933 = vsel %vm1608, %v1932, %v1924
        %v1934 = vrot.slane %v1926, 6
        %v1935 = vsel %vm1611, %v1934, %v1933
        %v1936 = vrot.slane %v1927, 5
        %v1937 = vsel %vm1614, %v1936, %v1935
        %v1938 = vrot.slane %v1928, 4
        %v1939 = vsel %vm1617, %v1938, %v1937
        %v1940 = vrot.slane %v1929, 3
        %v1941 = vsel %vm1620, %v1940, %v1939
        %v1942 = vrot.slane %v1930, 2
        %v1943 = vsel %vm1623, %v1942, %v1941
        %v1944 = vrot.slane %v1931, 1
        %v1945 = vsel %vm1626, %v1944, %v1943
        %v1946 = vpack.c.b16 %v1945, %v1945
        %v1948 = vsel %vm1676, %v1832, 0
        %v1951 = vsel %vm1883, %v1946, 0
        %1953 = vmatpush.bf16.msra.mxu0 0
        %1954 = vmatpush.bf16.msra.mxu0 0
        %1955 = vmatpush.bf16.msra.mxu0 0
        %1956 = vmatpush.bf16.msra.mxu0 0
        %1957 = vmatpush.bf16.msra.mxu0 0
        %1958 = vmatpush.bf16.msra.mxu0 0
        %1959 = vmatpush.bf16.msra.mxu0 0
        %1960 = vmatpush.bf16.msra.mxu0 %v1951
        %1961 = vmatmul.bf16.gmra.mxu0 %v1948
        %v1962 = vpop.f32.mrf.mxu0
        %v1963 = vadd.f32 0.0, %v1962
        %v1964 = vpop.f32.mrf.mxu0
        %1965 = vdwg.mxu0
        %v1966 = vld [vmem:[%s450] sm:$0xf]
        %v1967 = vpack.c.bf16 %v1963, %v1897
        %v1968 = vrot.slane %v1599, 1
        %v1969 = vsel %vm1608, %v1600, %v1968
        %v1970 = vrot.slane %v1601, 7
        %v1971 = vsel %vm1611, %v1970, %v1969
        %v1972 = vrot.slane %v1602, 6
        %v1973 = vsel %vm1614, %v1972, %v1971
        %v1974 = vrot.slane %v1603, 5
        %v1975 = vsel %vm1617, %v1974, %v1973
        %v1976 = vrot.slane %v1604, 4
        %v1977 = vsel %vm1620, %v1976, %v1975
        %v1978 = vrot.slane %v1605, 3
        %v1979 = vsel %vm1623, %v1978, %v1977
        %v1980 = vrot.slane %v1606, 2
        %v1981 = vsel %vm1626, %v1980, %v1979
        %v1982 = vpack.c.b16 %v1981, %v1981
        %v1983 = vrot.slane %v1653, 5
        %v1984 = vrot.slane %v1654, 4
        %v1985 = vsel %vm1608, %v1984, %v1983
        %v1986 = vrot.slane %v1655, 3
        %v1987 = vsel %vm1611, %v1986, %v1985
        %v1988 = vrot.slane %v1656, 2
        %v1989 = vsel %vm1614, %v1988, %v1987
        %v1990 = vrot.slane %v1657, 1
        %v1991 = vsel %vm1617, %v1990, %v1989
        %v1992 = vsel %vm1620, %v1658, %v1991
        %v1993 = vrot.slane %v1659, 7
        %v1994 = vsel %vm1623, %v1993, %v1992
        %v1995 = vrot.slane %v1660, 6
        %v1996 = vsel %vm1626, %v1995, %v1994
        %v1997 = vpack.c.b16 %v1996, %v1996
        %v1999 = vsel %vm1676, %v1982, 0
        %v2002 = vsel %vm1676, %v1997, 0
        %2004 = vmatpush.bf16.xpose.msra.mxu0 0
        %2005 = vmatpush.bf16.xpose.msra.mxu0 0
        %2006 = vmatpush.bf16.xpose.msra.mxu0 0
        %2007 = vmatpush.bf16.xpose.msra.mxu0 0
        %2008 = vmatpush.bf16.xpose.msra.mxu0 0
        %2009 = vmatpush.bf16.xpose.msra.mxu0 0
        %2010 = vmatpush.bf16.xpose.msra.mxu0 0
        %2011 = vmatpush.bf16.xpose.msra.mxu0 %v2002
        %2012 = vmatmul.bf16.gmra.mxu0 %v1999
        %v2013 = vpop.f32.mrf.mxu0
        %v2014 = vadd.f32 %v1574, %v2013
        %v2015 = vpop.f32.mrf.mxu0
        %2016 = vdwg.mxu0
        %v2017 = vrot.slane %v1720, 1
        %v2018 = vsel %vm1608, %v1721, %v2017
        %v2019 = vrot.slane %v1722, 7
        %v2020 = vsel %vm1611, %v2019, %v2018
        %v2021 = vrot.slane %v1723, 6
        %v2022 = vsel %vm1614, %v2021, %v2020
        %v2023 = vrot.slane %v1724, 5
        %v2024 = vsel %vm1617, %v2023, %v2022
        %v2025 = vrot.slane %v1725, 4
        %v2026 = vsel %vm1620, %v2025, %v2024
        %v2027 = vrot.slane %v1726, 3
        %v2028 = vsel %vm1623, %v2027, %v2026
        %v2029 = vrot.slane %v1727, 2
        %v2030 = vsel %vm1626, %v2029, %v2028
        %v2031 = vpack.c.b16 %v2030, %v2030
        %v2032 = vrot.slane %v1767, 5
        %v2033 = vrot.slane %v1768, 4
        %v2034 = vsel %vm1608, %v2033, %v2032
        %v2035 = vrot.slane %v1769, 3
        %v2036 = vsel %vm1611, %v2035, %v2034
        %v2037 = vrot.slane %v1770, 2
        %v2038 = vsel %vm1614, %v2037, %v2036
        %v2039 = vrot.slane %v1771, 1
        %v2040 = vsel %vm1617, %v2039, %v2038
        %v2041 = vsel %vm1620, %v1772, %v2040
        %v2042 = vrot.slane %v1773, 7
        %v2043 = vsel %vm1623, %v2042, %v2041
        %v2044 = vrot.slane %v1774, 6
        %v2045 = vsel %vm1626, %v2044, %v2043
        %v2046 = vpack.c.b16 %v2045, %v2045
        %v2048 = vsel %vm1676, %v2031, 0
        %v2051 = vsel %vm1676, %v2046, 0
        %2053 = vmatpush.bf16.xpose.msra.mxu0 0
        %2054 = vmatpush.bf16.xpose.msra.mxu0 0
        %2055 = vmatpush.bf16.xpose.msra.mxu0 0
        %2056 = vmatpush.bf16.xpose.msra.mxu0 0
        %2057 = vmatpush.bf16.xpose.msra.mxu0 0
        %2058 = vmatpush.bf16.xpose.msra.mxu0 0
        %2059 = vmatpush.bf16.xpose.msra.mxu0 0
        %2060 = vmatpush.bf16.xpose.msra.mxu0 %v2051
        %2061 = vmatmul.bf16.gmra.mxu0 %v2048
        %v2062 = vpop.f32.mrf.mxu0
        %v2063 = vadd.f32 %v1574, %v2062
        %v2064 = vpop.f32.mrf.mxu0
        %2065 = vdwg.mxu0
        %v2066 = vsel %vm1676, %v2014, -inf
        %2067 = vmax.xlane.f32.xlu0 %v2066
        %v2068 = vpop.xlane.xlu0 %2067
        %v2069 = vsel %vm1676, %v2063, -inf
        %2070 = vmax.xlane.f32.xlu0 %v2069
        %v2071 = vpop.xlane.xlu0 %2070
        %v2072 = vsub.f32 %v2014, %v2068
        %v2073 = vsub.f32 %v2063, %v2071
        %v2074 = vmul.f32 %v2072, 1.442695
        %v2075 = vpow.pop %v2074
        %v2076 = vmul.f32 %v2073, 1.442695
        %v2077 = vpow.pop %v2076
        %v2078 = vsel %vm1676, %v2075, 0.0
        %2079 = vadd.xlane.f32.xlu0 %v2078
        %v2080 = vpop.xlane.xlu0 %2079
        %v2081 = vsel %vm1676, %v2077, 0.0
        %2082 = vadd.xlane.f32.xlu0 %v2081
        %v2083 = vpop.xlane.xlu0 %2082
        %v2084 = vrcp.pop %v2080
        %v2085 = vrcp.pop %v2083
        %v2086 = vmul.f32 %v2075, %v2084
        %v2087 = vmul.f32 %v2077, %v2085
        %v2088 = vpack.c.bf16 %v2086, %v2086
        %v2089 = vpack.c.bf16 %v2087, %v2087
        %v2090 = vrot.slane %v1857, 1
        %v2091 = vsel %vm1608, %v1858, %v2090
        %v2092 = vrot.slane %v1859, 7
        %v2093 = vsel %vm1611, %v2092, %v2091
        %v2094 = vrot.slane %v1860, 6
        %v2095 = vsel %vm1614, %v2094, %v2093
        %v2096 = vrot.slane %v1861, 5
        %v2097 = vsel %vm1617, %v2096, %v2095
        %v2098 = vrot.slane %v1862, 4
        %v2099 = vsel %vm1620, %v2098, %v2097
        %v2100 = vrot.slane %v1863, 3
        %v2101 = vsel %vm1623, %v2100, %v2099
        %v2102 = vrot.slane %v1864, 2
        %v2103 = vsel %vm1626, %v2102, %v2101
        %v2104 = vpack.c.b16 %v2103, %v2103
        %v2106 = vsel %vm1676, %v2088, 0
        %v2109 = vsel %vm1883, %v2104, 0
        %2111 = vmatpush.bf16.msra.mxu0 0
        %2112 = vmatpush.bf16.msra.mxu0 0
        %2113 = vmatpush.bf16.msra.mxu0 0
        %2114 = vmatpush.bf16.msra.mxu0 0
        %2115 = vmatpush.bf16.msra.mxu0 0
        %2116 = vmatpush.bf16.msra.mxu0 0
        %2117 = vmatpush.bf16.msra.mxu0 0
        %2118 = vmatpush.bf16.msra.mxu0 %v2109
        %2119 = vmatmul.bf16.gmra.mxu0 %v2106
        %v2120 = vpop.f32.mrf.mxu0
        %v2121 = vadd.f32 0.0, %v2120
        %v2122 = vpop.f32.mrf.mxu0
        %2123 = vdwg.mxu0
        %v2124 = vrot.slane %v1924, 1
        %v2125 = vsel %vm1608, %v1925, %v2124
        %v2126 = vrot.slane %v1926, 7
        %v2127 = vsel %vm1611, %v2126, %v2125
        %v2128 = vrot.slane %v1927, 6
        %v2129 = vsel %vm1614, %v2128, %v2127
        %v2130 = vrot.slane %v1928, 5
        %v2131 = vsel %vm1617, %v2130, %v2129
        %v2132 = vrot.slane %v1929, 4
        %v2133 = vsel %vm1620, %v2132, %v2131
        %v2134 = vrot.slane %v1930, 3
        %v2135 = vsel %vm1623, %v2134, %v2133
        %v2136 = vrot.slane %v1931, 2
        %v2137 = vsel %vm1626, %v2136, %v2135
        %v2138 = vpack.c.b16 %v2137, %v2137
        %v2140 = vsel %vm1676, %v2089, 0
        %v2143 = vsel %vm1883, %v2138, 0
        %2145 = vmatpush.bf16.msra.mxu0 0
        %2146 = vmatpush.bf16.msra.mxu0 0
        %2147 = vmatpush.bf16.msra.mxu0 0
        %2148 = vmatpush.bf16.msra.mxu0 0
        %2149 = vmatpush.bf16.msra.mxu0 0
        %2150 = vmatpush.bf16.msra.mxu0 0
        %2151 = vmatpush.bf16.msra.mxu0 0
        %2152 = vmatpush.bf16.msra.mxu0 %v2143
        %2153 = vmatmul.bf16.gmra.mxu0 %v2140
        %v2154 = vpop.f32.mrf.mxu0
        %v2155 = vadd.f32 0.0, %v2154
        %v2156 = vpop.f32.mrf.mxu0
        %2157 = vdwg.mxu0
        %v2158 = vld [vmem:[%s450 + $0x4] sm:$0xf]
        %v2159 = vpack.c.bf16 %v2155, %v2121
        %v2161 = vsel %vm1676, %v2159, 0
        %v2164 = vsel %vm1883, %v2158, 0
        %2166 = vmatpush.bf16.msra.mxu0 0
        %2167 = vmatpush.bf16.msra.mxu0 0
        %2168 = vmatpush.bf16.msra.mxu0 0
        %2169 = vmatpush.bf16.msra.mxu0 0
        %2170 = vmatpush.bf16.msra.mxu0 0
        %2171 = vmatpush.bf16.msra.mxu0 0
        %2172 = vmatpush.bf16.msra.mxu0 0
        %2173 = vmatpush.bf16.msra.mxu0 %v2164
        %2174 = vmatmul.bf16.gmra.mxu0 %v2161
        %v2175 = vpop.f32.mrf.mxu0
        %v2176 = vadd.f32 0.0, %v2175
        %v2177 = vpop.f32.mrf.mxu0
        %v2178 = vadd.f32 0.0, %v2177
        %2179 = vdwg.mxu0
        %v2181 = vsel %vm1676, %v1967, 0
        %v2184 = vsel %vm1883, %v1966, 0
        %2186 = vmatpush.bf16.msra.mxu0 0
        %2187 = vmatpush.bf16.msra.mxu0 0
        %2188 = vmatpush.bf16.msra.mxu0 0
        %2189 = vmatpush.bf16.msra.mxu0 0
        %2190 = vmatpush.bf16.msra.mxu0 0
        %2191 = vmatpush.bf16.msra.mxu0 0
        %2192 = vmatpush.bf16.msra.mxu0 0
        %2193 = vmatpush.bf16.msra.mxu0 %v2184
        %2194 = vmatmul.bf16.gmra.mxu0 %v2181
        %v2195 = vpop.f32.mrf.mxu0
        %v2196 = vadd.f32 %v2176, %v2195
        %v2197 = vpop.f32.mrf.mxu0
        %v2198 = vadd.f32 %v2178, %v2197
        %2199 = vdwg.mxu0
        %v2200 = vrot.slane %v1599, 2
        %v2201 = vrot.slane %v1600, 1
        %v2202 = vsel %vm1608, %v2201, %v2200
        %v2203 = vsel %vm1611, %v1601, %v2202
        %v2204 = vrot.slane %v1602, 7
        %v2205 = vsel %vm1614, %v2204, %v2203
        %v2206 = vrot.slane %v1603, 6
        %v2207 = vsel %vm1617, %v2206, %v2205
        %v2208 = vrot.slane %v1604, 5
        %v2209 = vsel %vm1620, %v2208, %v2207
        %v2210 = vrot.slane %v1605, 4
        %v2211 = vsel %vm1623, %v2210, %v2209
        %v2212 = vrot.slane %v1606, 3
        %v2213 = vsel %vm1626, %v2212, %v2211
        %v2214 = vpack.c.b16 %v2213, %v2213
        %v2215 = vrot.slane %v1653, 6
        %v2216 = vrot.slane %v1654, 5
        %v2217 = vsel %vm1608, %v2216, %v2215
        %v2218 = vrot.slane %v1655, 4
        %v2219 = vsel %vm1611, %v2218, %v2217
        %v2220 = vrot.slane %v1656, 3
        %v2221 = vsel %vm1614, %v2220, %v2219
        %v2222 = vrot.slane %v1657, 2
        %v2223 = vsel %vm1617, %v2222, %v2221
        %v2224 = vrot.slane %v1658, 1
        %v2225 = vsel %vm1620, %v2224, %v2223
        %v2226 = vsel %vm1623, %v1659, %v2225
        %v2227 = vrot.slane %v1660, 7
        %v2228 = vsel %vm1626, %v2227, %v2226
        %v2229 = vpack.c.b16 %v2228, %v2228
        %v2231 = vsel %vm1676, %v2214, 0
        %v2234 = vsel %vm1676, %v2229, 0
        %2236 = vmatpush.bf16.xpose.msra.mxu0 0
        %2237 = vmatpush.bf16.xpose.msra.mxu0 0
        %2238 = vmatpush.bf16.xpose.msra.mxu0 0
        %2239 = vmatpush.bf16.xpose.msra.mxu0 0
        %2240 = vmatpush.bf16.xpose.msra.mxu0 0
        %2241 = vmatpush.bf16.xpose.msra.mxu0 0
        %2242 = vmatpush.bf16.xpose.msra.mxu0 0
        %2243 = vmatpush.bf16.xpose.msra.mxu0 %v2234
        %2244 = vmatmul.bf16.gmra.mxu0 %v2231
        %v2245 = vpop.f32.mrf.mxu0
        %v2246 = vadd.f32 %v1574, %v2245
        %v2247 = vpop.f32.mrf.mxu0
        %2248 = vdwg.mxu0
        %v2249 = vrot.slane %v1720, 2
        %v2250 = vrot.slane %v1721, 1
        %v2251 = vsel %vm1608, %v2250, %v2249
        %v2252 = vsel %vm1611, %v1722, %v2251
        %v2253 = vrot.slane %v1723, 7
        %v2254 = vsel %vm1614, %v2253, %v2252
        %v2255 = vrot.slane %v1724, 6
        %v2256 = vsel %vm1617, %v2255, %v2254
        %v2257 = vrot.slane %v1725, 5
        %v2258 = vsel %vm1620, %v2257, %v2256
        %v2259 = vrot.slane %v1726, 4
        %v2260 = vsel %vm1623, %v2259, %v2258
        %v2261 = vrot.slane %v1727, 3
        %v2262 = vsel %vm1626, %v2261, %v2260
        %v2263 = vpack.c.b16 %v2262, %v2262
        %v2264 = vrot.slane %v1767, 6
        %v2265 = vrot.slane %v1768, 5
        %v2266 = vsel %vm1608, %v2265, %v2264
        %v2267 = vrot.slane %v1769, 4
        %v2268 = vsel %vm1611, %v2267, %v2266
        %v2269 = vrot.slane %v1770, 3
        %v2270 = vsel %vm1614, %v2269, %v2268
        %v2271 = vrot.slane %v1771, 2
        %v2272 = vsel %vm1617, %v2271, %v2270
        %v2273 = vrot.slane %v1772, 1
        %v2274 = vsel %vm1620, %v2273, %v2272
        %v2275 = vsel %vm1623, %v1773, %v2274
        %v2276 = vrot.slane %v1774, 7
        %v2277 = vsel %vm1626, %v2276, %v2275
        %v2278 = vpack.c.b16 %v2277, %v2277
        %v2280 = vsel %vm1676, %v2263, 0
        %v2283 = vsel %vm1676, %v2278, 0
        %2285 = vmatpush.bf16.xpose.msra.mxu0 0
        %2286 = vmatpush.bf16.xpose.msra.mxu0 0
        %2287 = vmatpush.bf16.xpose.msra.mxu0 0
        %2288 = vmatpush.bf16.xpose.msra.mxu0 0
        %2289 = vmatpush.bf16.xpose.msra.mxu0 0
        %2290 = vmatpush.bf16.xpose.msra.mxu0 0
        %2291 = vmatpush.bf16.xpose.msra.mxu0 0
        %2292 = vmatpush.bf16.xpose.msra.mxu0 %v2283
        %2293 = vmatmul.bf16.gmra.mxu0 %v2280
        %v2294 = vpop.f32.mrf.mxu0
        %v2295 = vadd.f32 %v1574, %v2294
        %v2296 = vpop.f32.mrf.mxu0
        %2297 = vdwg.mxu0
        %v2298 = vsel %vm1676, %v2246, -inf
        %2299 = vmax.xlane.f32.xlu0 %v2298
        %v2300 = vpop.xlane.xlu0 %2299
        %v2301 = vsel %vm1676, %v2295, -inf
        %2302 = vmax.xlane.f32.xlu0 %v2301
        %v2303 = vpop.xlane.xlu0 %2302
        %v2304 = vsub.f32 %v2246, %v2300
        %v2305 = vsub.f32 %v2295, %v2303
        %v2306 = vmul.f32 %v2304, 1.442695
        %v2307 = vpow.pop %v2306
        %v2308 = vmul.f32 %v2305, 1.442695
        %v2309 = vpow.pop %v2308
        %v2310 = vsel %vm1676, %v2307, 0.0
        %2311 = vadd.xlane.f32.xlu0 %v2310
        %v2312 = vpop.xlane.xlu0 %2311
        %v2313 = vsel %vm1676, %v2309, 0.0
        %2314 = vadd.xlane.f32.xlu0 %v2313
        %v2315 = vpop.xlane.xlu0 %2314
        %v2316 = vrcp.pop %v2312
        %v2317 = vrcp.pop %v2315
        %v2318 = vmul.f32 %v2307, %v2316
        %v2319 = vmul.f32 %v2309, %v2317
        %v2320 = vpack.c.bf16 %v2318, %v2318
        %v2321 = vpack.c.bf16 %v2319, %v2319
        %v2322 = vrot.slane %v1857, 2
        %v2323 = vrot.slane %v1858, 1
        %v2324 = vsel %vm1608, %v2323, %v2322
        %v2325 = vsel %vm1611, %v1859, %v2324
        %v2326 = vrot.slane %v1860, 7
        %v2327 = vsel %vm1614, %v2326, %v2325
        %v2328 = vrot.slane %v1861, 6
        %v2329 = vsel %vm1617, %v2328, %v2327
        %v2330 = vrot.slane %v1862, 5
        %v2331 = vsel %vm1620, %v2330, %v2329
        %v2332 = vrot.slane %v1863, 4
        %v2333 = vsel %vm1623, %v2332, %v2331
        %v2334 = vrot.slane %v1864, 3
        %v2335 = vsel %vm1626, %v2334, %v2333
        %v2336 = vpack.c.b16 %v2335, %v2335
        %v2338 = vsel %vm1676, %v2320, 0
        %v2341 = vsel %vm1883, %v2336, 0
        %2343 = vmatpush.bf16.msra.mxu0 0
        %2344 = vmatpush.bf16.msra.mxu0 0
        %2345 = vmatpush.bf16.msra.mxu0 0
        %2346 = vmatpush.bf16.msra.mxu0 0
        %2347 = vmatpush.bf16.msra.mxu0 0
        %2348 = vmatpush.bf16.msra.mxu0 0
        %2349 = vmatpush.bf16.msra.mxu0 0
        %2350 = vmatpush.bf16.msra.mxu0 %v2341
        %2351 = vmatmul.bf16.gmra.mxu0 %v2338
        %v2352 = vpop.f32.mrf.mxu0
        %v2353 = vadd.f32 0.0, %v2352
        %v2354 = vpop.f32.mrf.mxu0
        %2355 = vdwg.mxu0
        %v2356 = vrot.slane %v1924, 2
        %v2357 = vrot.slane %v1925, 1
        %v2358 = vsel %vm1608, %v2357, %v2356
        %v2359 = vsel %vm1611, %v1926, %v2358
        %v2360 = vrot.slane %v1927, 7
        %v2361 = vsel %vm1614, %v2360, %v2359
        %v2362 = vrot.slane %v1928, 6
        %v2363 = vsel %vm1617, %v2362, %v2361
        %v2364 = vrot.slane %v1929, 5
        %v2365 = vsel %vm1620, %v2364, %v2363
        %v2366 = vrot.slane %v1930, 4
        %v2367 = vsel %vm1623, %v2366, %v2365
        %v2368 = vrot.slane %v1931, 3
        %v2369 = vsel %vm1626, %v2368, %v2367
        %v2370 = vpack.c.b16 %v2369, %v2369
        %v2372 = vsel %vm1676, %v2321, 0
        %v2375 = vsel %vm1883, %v2370, 0
        %2377 = vmatpush.bf16.msra.mxu0 0
        %2378 = vmatpush.bf16.msra.mxu0 0
        %2379 = vmatpush.bf16.msra.mxu0 0
        %2380 = vmatpush.bf16.msra.mxu0 0
        %2381 = vmatpush.bf16.msra.mxu0 0
        %2382 = vmatpush.bf16.msra.mxu0 0
        %2383 = vmatpush.bf16.msra.mxu0 0
        %2384 = vmatpush.bf16.msra.mxu0 %v2375
        %2385 = vmatmul.bf16.gmra.mxu0 %v2372
        %v2386 = vpop.f32.mrf.mxu0
        %v2387 = vadd.f32 0.0, %v2386
        %v2388 = vpop.f32.mrf.mxu0
        %2389 = vdwg.mxu0
        %v2390 = vld [vmem:[%s450 + $0x8] sm:$0xf]
        %v2391 = vpack.c.bf16 %v2387, %v2353
        %v2393 = vsel %vm1676, %v2391, 0
        %v2396 = vsel %vm1883, %v2390, 0
        %2398 = vmatpush.bf16.msra.mxu0 0
        %2399 = vmatpush.bf16.msra.mxu0 0
        %2400 = vmatpush.bf16.msra.mxu0 0
        %2401 = vmatpush.bf16.msra.mxu0 0
        %2402 = vmatpush.bf16.msra.mxu0 0
        %2403 = vmatpush.bf16.msra.mxu0 0
        %2404 = vmatpush.bf16.msra.mxu0 0
        %2405 = vmatpush.bf16.msra.mxu0 %v2396
        %2406 = vmatmul.bf16.gmra.mxu0 %v2393
        %v2407 = vpop.f32.mrf.mxu0
        %v2408 = vadd.f32 0.0, %v2407
        %v2409 = vpop.f32.mrf.mxu0
        %v2410 = vadd.f32 0.0, %v2409
        %2411 = vdwg.mxu0
        %v2412 = vadd.f32 %v2196, %v2408
        %v2413 = vadd.f32 %v2198, %v2410
        %v2414 = vrot.slane %v1599, 3
        %v2415 = vrot.slane %v1600, 2
        %v2416 = vsel %vm1608, %v2415, %v2414
        %v2417 = vrot.slane %v1601, 1
        %v2418 = vsel %vm1611, %v2417, %v2416
        %v2419 = vsel %vm1614, %v1602, %v2418
        %v2420 = vrot.slane %v1603, 7
        %v2421 = vsel %vm1617, %v2420, %v2419
        %v2422 = vrot.slane %v1604, 6
        %v2423 = vsel %vm1620, %v2422, %v2421
        %v2424 = vrot.slane %v1605, 5
        %v2425 = vsel %vm1623, %v2424, %v2423
        %v2426 = vrot.slane %v1606, 4
        %v2427 = vsel %vm1626, %v2426, %v2425
        %v2428 = vpack.c.b16 %v2427, %v2427
        %v2429 = vrot.slane %v1653, 7
        %v2430 = vrot.slane %v1654, 6
        %v2431 = vsel %vm1608, %v2430, %v2429
        %v2432 = vrot.slane %v1655, 5
        %v2433 = vsel %vm1611, %v2432, %v2431
        %v2434 = vrot.slane %v1656, 4
        %v2435 = vsel %vm1614, %v2434, %v2433
        %v2436 = vrot.slane %v1657, 3
        %v2437 = vsel %vm1617, %v2436, %v2435
        %v2438 = vrot.slane %v1658, 2
        %v2439 = vsel %vm1620, %v2438, %v2437
        %v2440 = vrot.slane %v1659, 1
        %v2441 = vsel %vm1623, %v2440, %v2439
        %v2442 = vsel %vm1626, %v1660, %v2441
        %v2443 = vpack.c.b16 %v2442, %v2442
        %v2445 = vsel %vm1676, %v2428, 0
        %v2448 = vsel %vm1676, %v2443, 0
        %2450 = vmatpush.bf16.xpose.msra.mxu0 0
        %2451 = vmatpush.bf16.xpose.msra.mxu0 0
        %2452 = vmatpush.bf16.xpose.msra.mxu0 0
        %2453 = vmatpush.bf16.xpose.msra.mxu0 0
        %2454 = vmatpush.bf16.xpose.msra.mxu0 0
        %2455 = vmatpush.bf16.xpose.msra.mxu0 0
        %2456 = vmatpush.bf16.xpose.msra.mxu0 0
        %2457 = vmatpush.bf16.xpose.msra.mxu0 %v2448
        %2458 = vmatmul.bf16.gmra.mxu0 %v2445
        %v2459 = vpop.f32.mrf.mxu0
        %v2460 = vadd.f32 %v1574, %v2459
        %v2461 = vpop.f32.mrf.mxu0
        %2462 = vdwg.mxu0
        %v2463 = vrot.slane %v1720, 3
        %v2464 = vrot.slane %v1721, 2
        %v2465 = vsel %vm1608, %v2464, %v2463
        %v2466 = vrot.slane %v1722, 1
        %v2467 = vsel %vm1611, %v2466, %v2465
        %v2468 = vsel %vm1614, %v1723, %v2467
        %v2469 = vrot.slane %v1724, 7
        %v2470 = vsel %vm1617, %v2469, %v2468
        %v2471 = vrot.slane %v1725, 6
        %v2472 = vsel %vm1620, %v2471, %v2470
        %v2473 = vrot.slane %v1726, 5
        %v2474 = vsel %vm1623, %v2473, %v2472
        %v2475 = vrot.slane %v1727, 4
        %v2476 = vsel %vm1626, %v2475, %v2474
        %v2477 = vpack.c.b16 %v2476, %v2476
        %v2478 = vrot.slane %v1767, 7
        %v2479 = vrot.slane %v1768, 6
        %v2480 = vsel %vm1608, %v2479, %v2478
        %v2481 = vrot.slane %v1769, 5
        %v2482 = vsel %vm1611, %v2481, %v2480
        %v2483 = vrot.slane %v1770, 4
        %v2484 = vsel %vm1614, %v2483, %v2482
        %v2485 = vrot.slane %v1771, 3
        %v2486 = vsel %vm1617, %v2485, %v2484
        %v2487 = vrot.slane %v1772, 2
        %v2488 = vsel %vm1620, %v2487, %v2486
        %v2489 = vrot.slane %v1773, 1
        %v2490 = vsel %vm1623, %v2489, %v2488
        %v2491 = vsel %vm1626, %v1774, %v2490
        %v2492 = vpack.c.b16 %v2491, %v2491
        %v2494 = vsel %vm1676, %v2477, 0
        %v2497 = vsel %vm1676, %v2492, 0
        %2499 = vmatpush.bf16.xpose.msra.mxu0 0
        %2500 = vmatpush.bf16.xpose.msra.mxu0 0
        %2501 = vmatpush.bf16.xpose.msra.mxu0 0
        %2502 = vmatpush.bf16.xpose.msra.mxu0 0
        %2503 = vmatpush.bf16.xpose.msra.mxu0 0
        %2504 = vmatpush.bf16.xpose.msra.mxu0 0
        %2505 = vmatpush.bf16.xpose.msra.mxu0 0
        %2506 = vmatpush.bf16.xpose.msra.mxu0 %v2497
        %2507 = vmatmul.bf16.gmra.mxu0 %v2494
        %v2508 = vpop.f32.mrf.mxu0
        %v2509 = vadd.f32 %v1574, %v2508
        %v2510 = vpop.f32.mrf.mxu0
        %2511 = vdwg.mxu0
        %v2512 = vsel %vm1676, %v2460, -inf
        %2513 = vmax.xlane.f32.xlu0 %v2512
        %v2514 = vpop.xlane.xlu0 %2513
        %v2515 = vsel %vm1676, %v2509, -inf
        %2516 = vmax.xlane.f32.xlu0 %v2515
        %v2517 = vpop.xlane.xlu0 %2516
        %v2518 = vsub.f32 %v2460, %v2514
        %v2519 = vsub.f32 %v2509, %v2517
        %v2520 = vmul.f32 %v2518, 1.442695
        %v2521 = vpow.pop %v2520
        %v2522 = vmul.f32 %v2519, 1.442695
        %v2523 = vpow.pop %v2522
        %v2524 = vsel %vm1676, %v2521, 0.0
        %2525 = vadd.xlane.f32.xlu0 %v2524
        %v2526 = vpop.xlane.xlu0 %2525
        %v2527 = vsel %vm1676, %v2523, 0.0
        %2528 = vadd.xlane.f32.xlu0 %v2527
        %v2529 = vpop.xlane.xlu0 %2528
        %v2530 = vrcp.pop %v2526
        %v2531 = vrcp.pop %v2529
        %v2532 = vmul.f32 %v2521, %v2530
        %v2533 = vmul.f32 %v2523, %v2531
        %v2534 = vpack.c.bf16 %v2532, %v2532
        %v2535 = vpack.c.bf16 %v2533, %v2533
        %v2536 = vrot.slane %v1857, 3
        %v2537 = vrot.slane %v1858, 2
        %v2538 = vsel %vm1608, %v2537, %v2536
        %v2539 = vrot.slane %v1859, 1
        %v2540 = vsel %vm1611, %v2539, %v2538
        %v2541 = vsel %vm1614, %v1860, %v2540
        %v2542 = vrot.slane %v1861, 7
        %v2543 = vsel %vm1617, %v2542, %v2541
        %v2544 = vrot.slane %v1862, 6
        %v2545 = vsel %vm1620, %v2544, %v2543
        %v2546 = vrot.slane %v1863, 5
        %v2547 = vsel %vm1623, %v2546, %v2545
        %v2548 = vrot.slane %v1864, 4
        %v2549 = vsel %vm1626, %v2548, %v2547
        %v2550 = vpack.c.b16 %v2549, %v2549
        %v2552 = vsel %vm1676, %v2534, 0
        %v2555 = vsel %vm1883, %v2550, 0
        %2557 = vmatpush.bf16.msra.mxu0 0
        %2558 = vmatpush.bf16.msra.mxu0 0
        %2559 = vmatpush.bf16.msra.mxu0 0
        %2560 = vmatpush.bf16.msra.mxu0 0
        %2561 = vmatpush.bf16.msra.mxu0 0
        %2562 = vmatpush.bf16.msra.mxu0 0
        %2563 = vmatpush.bf16.msra.mxu0 0
        %2564 = vmatpush.bf16.msra.mxu0 %v2555
        %2565 = vmatmul.bf16.gmra.mxu0 %v2552
        %v2566 = vpop.f32.mrf.mxu0
        %v2567 = vadd.f32 0.0, %v2566
        %v2568 = vpop.f32.mrf.mxu0
        %2569 = vdwg.mxu0
        %v2570 = vrot.slane %v1924, 3
        %v2571 = vrot.slane %v1925, 2
        %v2572 = vsel %vm1608, %v2571, %v2570
        %v2573 = vrot.slane %v1926, 1
        %v2574 = vsel %vm1611, %v2573, %v2572
        %v2575 = vsel %vm1614, %v1927, %v2574
        %v2576 = vrot.slane %v1928, 7
        %v2577 = vsel %vm1617, %v2576, %v2575
        %v2578 = vrot.slane %v1929, 6
        %v2579 = vsel %vm1620, %v2578, %v2577
        %v2580 = vrot.slane %v1930, 5
        %v2581 = vsel %vm1623, %v2580, %v2579
        %v2582 = vrot.slane %v1931, 4
        %v2583 = vsel %vm1626, %v2582, %v2581
        %v2584 = vpack.c.b16 %v2583, %v2583
        %v2586 = vsel %vm1676, %v2535, 0
        %v2589 = vsel %vm1883, %v2584, 0
        %2591 = vmatpush.bf16.msra.mxu0 0
        %2592 = vmatpush.bf16.msra.mxu0 0
        %2593 = vmatpush.bf16.msra.mxu0 0
        %2594 = vmatpush.bf16.msra.mxu0 0
        %2595 = vmatpush.bf16.msra.mxu0 0
        %2596 = vmatpush.bf16.msra.mxu0 0
        %2597 = vmatpush.bf16.msra.mxu0 0
        %2598 = vmatpush.bf16.msra.mxu0 %v2589
        %2599 = vmatmul.bf16.gmra.mxu0 %v2586
        %v2600 = vpop.f32.mrf.mxu0
        %v2601 = vadd.f32 0.0, %v2600
        %v2602 = vpop.f32.mrf.mxu0
        %2603 = vdwg.mxu0
        %v2604 = vld [vmem:[%s450 + $0xc] sm:$0xf]
        %v2605 = vpack.c.bf16 %v2601, %v2567
        %v2607 = vsel %vm1676, %v2605, 0
        %v2610 = vsel %vm1883, %v2604, 0
        %2612 = vmatpush.bf16.msra.mxu0 0
        %2613 = vmatpush.bf16.msra.mxu0 0
        %2614 = vmatpush.bf16.msra.mxu0 0
        %2615 = vmatpush.bf16.msra.mxu0 0
        %2616 = vmatpush.bf16.msra.mxu0 0
        %2617 = vmatpush.bf16.msra.mxu0 0
        %2618 = vmatpush.bf16.msra.mxu0 0
        %2619 = vmatpush.bf16.msra.mxu0 %v2610
        %2620 = vmatmul.bf16.gmra.mxu0 %v2607
        %v2621 = vpop.f32.mrf.mxu0
        %v2622 = vadd.f32 0.0, %v2621
        %v2623 = vpop.f32.mrf.mxu0
        %v2624 = vadd.f32 0.0, %v2623
        %2625 = vdwg.mxu0
        %v2626 = vadd.f32 %v2412, %v2622
        %v2627 = vadd.f32 %v2413, %v2624
        %v2628 = vld [vmem:[%s455] sm:$0xf]
        %v2629 = vld [vmem:[%s455 + $0x4] sm:$0xf]
        %v2630 = vld [vmem:[%s455 + $0x8] sm:$0xf]
        %v2631 = vld [vmem:[%s455 + $0xc] sm:$0xf]
        %v2636 = vunpack.c.l.b16 %v2628
        %v2637 = vunpack.c.l.b16 %v2629
        %v2638 = vunpack.c.l.b16 %v2630
        %v2639 = vunpack.c.l.b16 %v2631
        %v2640 = vpack.c.b16 %v2637, %v2636
        %v2641 = vpack.c.b16 %v2639, %v2638
        %2644 = vmatpush.bf16.msra.mxu0 0
        %2645 = vmatpush.bf16.msra.mxu0 0
        %2646 = vmatpush.bf16.msra.mxu0 0
        %2647 = vmatpush.bf16.msra.mxu0 0
        %2648 = vmatpush.bf16.msra.mxu0 0
        %2649 = vmatpush.bf16.msra.mxu0 0
        %2650 = vmatpush.bf16.msra.mxu0 %v2641
        %2651 = vmatpush.bf16.msra.mxu0 %v2640
        %2652 = vmatmul.bf16.gmra.mxu0 %v555
        %v2653 = vpop.f32.mrf.mxu0
        %v2654 = vadd.f32 0.0, %v2653
        %v2655 = vpop.f32.mrf.mxu0
        %v2656 = vadd.f32 0.0, %v2655
        %2657 = vdwg.mxu0
        %v2658 = vmul.f32 %v2654, 0.5
        %v2659 = vmul.f32 %v2656, 0.5
        %v2660 = vmul.f32 %v2654, 0.044715
        %v2661 = vmul.f32 %v2656, 0.044715
        %v2662 = vmul.f32 %v2660, %v2654
        %v2663 = vmul.f32 %v2661, %v2656
        %v2664 = vmul.f32 %v2662, %v2654
        %v2665 = vmul.f32 %v2663, %v2656
        %v2666 = vadd.f32 %v2654, %v2664
        %v2667 = vadd.f32 %v2656, %v2665
        %v2668 = vmul.f32 %v2666, 0.7978846
        %v2669 = vmul.f32 %v2667, 0.7978846
        %v2670 = vtanh.pop %v2668
        %v2671 = vtanh.pop %v2669
        %v2672 = vadd.f32 %v2670, 1.0
        %v2673 = vadd.f32 %v2671, 1.0
        %v2674 = vmul.f32 %v2658, %v2672
        %v2675 = vmul.f32 %v2659, %v2673
        %v2676 = vpack.c.bf16 %v2675, %v2674
        %v2677 = vld [vmem:[%s460] sm:$0xf]
        %v2678 = vld [vmem:[%s460 + $0x4] sm:$0xf]
        %v2679 = vld [vmem:[%s460 + $0x8] sm:$0xf]
        %v2680 = vld [vmem:[%s460 + $0xc] sm:$0xf]
        %v2681 = vld [vmem:[%s460 + $0x10] sm:$0xf]
        %v2682 = vld [vmem:[%s460 + $0x14] sm:$0xf]
        %v2683 = vld [vmem:[%s460 + $0x18] sm:$0xf]
        %v2684 = vld [vmem:[%s460 + $0x1c] sm:$0xf]
        %v2685 = vld [vmem:[%s460 + $0x20] sm:$0xf]
        %v2686 = vld [vmem:[%s460 + $0x24] sm:$0xf]
        %v2687 = vld [vmem:[%s460 + $0x28] sm:$0xf]
        %v2688 = vld [vmem:[%s460 + $0x2c] sm:$0xf]
        %v2689 = vld [vmem:[%s460 + $0x30] sm:$0xf]
        %v2690 = vld [vmem:[%s460 + $0x34] sm:$0xf]
        %v2691 = vld [vmem:[%s460 + $0x38] sm:$0xf]
        %v2692 = vld [vmem:[%s460 + $0x3c] sm:$0xf]
        %v2709 = vunpack.c.l.b16 %v2677
        %v2710 = vunpack.c.l.b16 %v2678
        %v2711 = vunpack.c.l.b16 %v2679
        %v2712 = vunpack.c.l.b16 %v2680
        %v2713 = vunpack.c.l.b16 %v2681
        %v2714 = vunpack.c.l.b16 %v2682
        %v2715 = vunpack.c.l.b16 %v2683
        %v2716 = vunpack.c.l.b16 %v2684
        %v2717 = vunpack.c.l.b16 %v2685
        %v2718 = vunpack.c.l.b16 %v2686
        %v2719 = vunpack.c.l.b16 %v2687
        %v2720 = vunpack.c.l.b16 %v2688
        %v2721 = vunpack.c.l.b16 %v2689
        %v2722 = vunpack.c.l.b16 %v2690
        %v2723 = vunpack.c.l.b16 %v2691
        %v2724 = vunpack.c.l.b16 %v2692
        %v2725 = vpack.c.b16 %v2710, %v2709
        %v2726 = vpack.c.b16 %v2712, %v2711
        %v2727 = vpack.c.b16 %v2714, %v2713
        %v2728 = vpack.c.b16 %v2716, %v2715
        %v2729 = vpack.c.b16 %v2718, %v2717
        %v2730 = vpack.c.b16 %v2720, %v2719
        %v2731 = vpack.c.b16 %v2722, %v2721
        %v2732 = vpack.c.b16 %v2724, %v2723
        %2741 = vmatpush.bf16.msra.mxu0 %v2732
        %2742 = vmatpush.bf16.msra.mxu0 %v2731
        %2743 = vmatpush.bf16.msra.mxu0 %v2730
        %2744 = vmatpush.bf16.msra.mxu0 %v2729
        %2745 = vmatpush.bf16.msra.mxu0 %v2728
        %2746 = vmatpush.bf16.msra.mxu0 %v2727
        %2747 = vmatpush.bf16.msra.mxu0 %v2726
        %2748 = vmatpush.bf16.msra.mxu0 %v2725
        %2749 = vmatmul.bf16.gmra.mxu0 %v2676
        %v2750 = vpop.f32.mrf.mxu0
        %v2751 = vadd.f32 0.0, %v2750
        %v2752 = vpop.f32.mrf.mxu0
        %v2753 = vadd.f32 0.0, %v2752
        %2754 = vdwg.mxu0
        %v2755 = vadd.f32 %v471, %v2626
        %v2756 = vadd.f32 %v472, %v2627
        %v2757 = vadd.f32 %v2755, %v2751
        %v2758 = vadd.f32 %v2756, %v2753
        %2759 = vst.msk [vmem:[#allocation2] sm:$0xff] %vm475, %v2757
        %2760 = vst.msk [vmem:[#allocation2 + $0x8] sm:$0xff] %vm475, %v2758
        %p2761 = scmp.eq.s32.totalorder %s23, 1
        // Predicated region
        $region69: #{falcon_forward.1} parent=63 // pred_check
          %p2762 = pneg %p2761
        $region70: #{falcon_forward.1} parent=63 // pred_check_branch
          %2764 = sbr.rel (%p2762) target = $region72
        $region71: #{falcon_forward.1} parent=63 // pred_region
          %v2765 = vld [vmem:[%s9] sm:$0x1]
          %v2766 = vld [vmem:[%s10] sm:$0x1]
          %v2767 = vsel %vm475, %v2757, 0.0
          %2768 = vadd.xlane.f32.xlu0 %v2767
          %v2769 = vpop.xlane.xlu0 %2768
          %v2770 = vsel %vm475, %v2758, 0.0
          %2771 = vadd.xlane.f32.xlu0 %v2770
          %v2772 = vpop.xlane.xlu0 %2771
          %v2773 = vmul.f32 %v2769, %v488
          %v2774 = vmul.f32 %v2772, %v488
          %v2775 = vsub.f32 %v2757, %v2773
          %v2776 = vsub.f32 %v2758, %v2774
          %v2777 = vmul.f32 %v2775, %v2775
          %v2778 = vmul.f32 %v2776, %v2776
          %v2779 = vsel %vm475, %v2777, 0.0
          %2780 = vadd.xlane.f32.xlu0 %v2779
          %v2781 = vpop.xlane.xlu0 %2780
          %v2782 = vsel %vm475, %v2778, 0.0
          %2783 = vadd.xlane.f32.xlu0 %v2782
          %v2784 = vpop.xlane.xlu0 %2783
          %v2785 = vmul.f32 %v2781, %v488
          %v2786 = vmul.f32 %v2784, %v488
          %v2787 = vadd.f32 %v2785, 1e-05
          %v2788 = vadd.f32 %v2786, 1e-05
          %v2789 = vrsqrt.pop %v2787
          %v2790 = vmul.f32 %v2789, %v2787
          %v2791 = vmul.f32 %v2790, %v2789
          %v2792 = vmul.f32 0.5, %v2791
          %v2793 = vsub.f32 1.5, %v2792
          %v2794 = vmul.f32 %v2789, %v2793
          %vm2795 = vweird.f32 %v2787
          %vm2796 = vweird.f32 %v2789
          %vm2797 = vmor %vm2795, %vm2796
          %v2798 = vsel %vm2797, %v2789, %v2794
          %v2799 = vrsqrt.pop %v2788
          %v2800 = vmul.f32 %v2799, %v2788
          %v2801 = vmul.f32 %v2800, %v2799
          %v2802 = vmul.f32 0.5, %v2801
          %v2803 = vsub.f32 1.5, %v2802
          %v2804 = vmul.f32 %v2799, %v2803
          %vm2805 = vweird.f32 %v2788
          %vm2806 = vweird.f32 %v2799
          %vm2807 = vmor %vm2805, %vm2806
          %v2808 = vsel %vm2807, %v2799, %v2804
          %v2809 = vmul.f32 %v2775, %v2798
          %v2810 = vmul.f32 %v2776, %v2808
          %v2812 = vperm.slane %v2765, 0
          %v2814 = vmul.f32 %v2809, %v2812
          %v2815 = vmul.f32 %v2810, %v2812
          %v2817 = vperm.slane %v2766, 0
          %v2819 = vadd.f32 %v2814, %v2817
          %v2820 = vadd.f32 %v2815, %v2817
          %2821 = vst.msk [vmem:[#allocation2] sm:$0xff] %vm475, %v2819
          %2822 = vst.msk [vmem:[#allocation2 + $0x8] sm:$0xff] %vm475, %v2820
        $region72: #{falcon_forward.1} parent=63 // pred_fallthru
          _
        // Predicated region
        $region73: #{falcon_forward.1} parent=63 // pred_check
          %p2823 = pneg %p297
        $region74: #{falcon_forward.1} parent=63 // pred_check_branch
          %2825 = sbr.rel (%p2823) target = $region76
        $region75: #{falcon_forward.1} parent=63 // pred_region
          %2827 = vsyncadd [#allocation3], 0
          %s2828 = sshll.u32 [#allocation2], 4
          %s2829 = int_to_ptr.vmem [resolvable:$true] %s2828
          %s2830 = sshll.u32 %s11, 4
          %s2831 = int_to_ptr.hbm [resolvable:$true] %s2830
          %2836 = dma.vmem_to_hbm [thread:$0]  %s2829, 256, %s2831, [#allocation3], 128, 128, 8
        $region76: #{falcon_forward.1} parent=63 // pred_fallthru
          _
        // Predicated region
        $region77: #{falcon_forward.1} parent=63 // pred_check
          %p2837 = pneg %p297
        $region78: #{falcon_forward.1} parent=63 // pred_check_branch
          %2839 = sbr.rel (%p2837) target = $region80
        $region79: #{falcon_forward.1} parent=63 // pred_region
          %2841 = dma.done [#allocation3], 256
        $region80: #{falcon_forward.1} parent=63 // pred_fallthru
          _
      $region64: #{falcon_forward.1} parent=5 // pred_fallthru
        _
      %p2842 = scmp.le.s32.totalorder 2, %s18
      // Predicated region
      $region81: #{falcon_forward.1} parent=5 // pred_check
        %p2843 = pneg %p2842
      $region82: #{falcon_forward.1} parent=5 // pred_check_branch
        %2845 = sbr.rel (%p2843) target = $region84
      $region83: #{falcon_forward.1} parent=5 // pred_region
        %s2846 = ssub.s32 %s18, 2
      $region84: #{falcon_forward.1} parent=5 // pred_fallthru
        _
    $region6: #{falcon_forward.1} parent=1 // loop_footer
      %s22 = sadd.s32 1, %s18
    $region7: #{falcon_forward.1} parent=1 // loop_footer_branch
      %17 = sbr.rel target = $region3
    $region8: #{falcon_forward.1} parent=1 // loop_exit
      _
    %2847 = vsyncpa [#allocation3], 1
    %s2848 = scalar_lea.sflag [#allocation3], 1
    %2849 = vsyncpa %s2848, 1

</llo_original>
